<compile_context>
chip_gen: v7x
topology: tpu7x:2x2x1
jax: 0.10.0
libtpu: 0.0.40
codegen_flags: <defaults>
</compile_context>

<pallas_src>
import numpy as np
import jax
import jax.numpy as jnp
from jax.experimental import pallas as pl
from jax.experimental.pallas import tpu as pltpu


def _io_b_voter_kernel(i_ref,                      # scalar prefetch: starter index
                       x_ref, adj_ref,
                       wx_ref, we_ref, whh_ref, bh_ref,
                       wo1_ref, wo2_ref, bo_ref,
                       out_ref):
    TB, N, dim = x_ref.shape
    hid = wx_ref.shape[1]
    f32 = jnp.float32

    x3 = x_ref[...]                                              # (TB, N, dim)

    # starter = x[:, i, :] gathered in-kernel (iota mask-reduce, no dyn slice)
    node_ids = jax.lax.broadcasted_iota(jnp.int32, (N, 1), 0)    # (N, 1)
    pick = (node_ids == i_ref[0]).astype(f32)                    # (N, 1)
    starter = jnp.sum(x3 * pick, axis=1)                         # (TB, dim)

    # n2e on concat(node, ender) without materializing the concat:
    #   h = relu(x @ Wx + broadcast_over_nodes(starter @ We) + b0)
    x2 = x3.reshape(TB * N, dim)
    hx = jnp.dot(x2, wx_ref[...], preferred_element_type=f32)    # (TB*N, hid)
    he = jnp.dot(starter, we_ref[...], preferred_element_type=f32)  # (TB, hid)
    h = hx.reshape(TB, N, hid) + he[:, None, :] + bh_ref[0:1, :]
    h = jnp.maximum(h, 0.0)                                      # (TB, N, hid)

    # e2e + relu
    h2 = jnp.dot(h.reshape(TB * N, hid), whh_ref[0],
                 preferred_element_type=f32) + bh_ref[1:2, :]
    h2 = jnp.maximum(h2, 0.0)                                    # (TB*N, hid)

    # adjacency-weighted per-batch node reduction, linear in B (no selector)
    adj = adj_ref[...]                                           # (N, 1)
    s = jnp.sum(h2.reshape(TB, N, hid) * adj, axis=1)            # (TB, hid)

    # e2n + relu, n2n + relu
    t = jnp.dot(s, whh_ref[1], preferred_element_type=f32) + bh_ref[2:3, :]
    t = jnp.maximum(t, 0.0)
    t = jnp.dot(t, whh_ref[2], preferred_element_type=f32) + bh_ref[3:4, :]
    t = jnp.maximum(t, 0.0)                                      # (TB, hid)

    # output(concat(starter, t)) = starter @ Wo1 + t @ Wo2 + b
    logits = (jnp.dot(starter, wo1_ref[...], preferred_element_type=f32)
              + jnp.dot(t, wo2_ref[...], preferred_element_type=f32)
              + bo_ref[...])                                     # (TB, dim)

    # log-softmax over the feature axis (kept in f32)
    m = jnp.max(logits, axis=-1, keepdims=True)
    z = logits - m
    lse = jnp.log(jnp.sum(jnp.exp(z), axis=-1, keepdims=True))
    out_ref[...] = (z - lse).astype(out_ref.dtype)


def pack_params(params):
    """One-time parameter packing; hoisted out of the per-call forward path."""
    hid, dim2 = params["n2e_w"].shape
    dim = dim2 // 2
    f32 = jnp.float32
    return {
        "wx":  jnp.asarray(params["n2e_w"][:, :dim].T, f32),       # (dim, hid)
        "we":  jnp.asarray(params["n2e_w"][:, dim:].T, f32),       # (dim, hid)
        "whh": jnp.stack([params["e2e_w"].T, params["e2n_w"].T,
                          params["n2n_w"].T]).astype(f32),         # (3, hid, hid)
        "bh":  jnp.stack([params["n2e_b"], params["e2e_b"],
                          params["e2n_b"], params["n2n_b"]]).astype(f32),  # (4, hid)
        "wo1": jnp.asarray(params["out_w"][:, :dim].T, f32),       # (dim, dim)
        "wo2": jnp.asarray(params["out_w"][:, dim:].T, f32),       # (hid, dim)
        "bo":  jnp.asarray(params["out_b"].reshape(1, dim), f32),  # (1, dim)
    }


def _pick_batch_tile(B, cap=256):
    # Largest divisor of B that is a multiple of 8 (sublane-aligned out tile);
    # otherwise process the whole batch in a single grid step.
    for cand in range(min(B, cap), 7, -1):
        if B % cand == 0 and cand % 8 == 0:
            return cand
    return B


def io_b_voter_forward(x, adj_col, i, packed, num=None, node_size=None, *, tb=None):
    """Pallas implementation of IO_B_Voter.forward (num/node_size collapse away)."""
    B, N, dim = x.shape
    hid = packed["wx"].shape[1]

    if tb is None:
        tb = _pick_batch_tile(B)
    assert B % tb == 0 and (tb % 8 == 0 or tb == B), "bad batch tile"
    grid = (B // tb,)

    x = x.astype(jnp.float32)
    adj2 = adj_col.astype(jnp.float32).reshape(N, 1)
    i_arr = jnp.asarray([i], dtype=jnp.int32)

    # Advisory cost estimate so XLA can schedule neighbors around the call.
    flops = int(2 * B * (N * dim * hid + dim * hid + N * hid * hid
                         + 2 * hid * hid + dim * (dim + hid))
                + 2 * B * N * (hid + dim) + 4 * B * dim)
    param_bytes = sum(int(v.size) * v.dtype.itemsize for v in packed.values())
    bytes_accessed = int(x.size * 4 + adj2.size * 4 + 4 + param_bytes + B * dim * 4)
    transcendentals = int(B * (dim + 1))

    def const(shape):
        return pl.BlockSpec(shape, lambda b, sref: (0,) * len(shape))

    out = pl.pallas_call(
        _io_b_voter_kernel,
        out_shape=jax.ShapeDtypeStruct((B, dim), jnp.float32),
        grid_spec=pltpu.PrefetchScalarGridSpec(
            num_scalar_prefetch=1,
            grid=grid,
            in_specs=[
                pl.BlockSpec((tb, N, dim), lambda b, sref: (b, 0, 0)),  # x batch tile
                const((N, 1)),          # adj column
                const((dim, hid)),      # n2e weight, node half
                const((dim, hid)),      # n2e weight, ender (starter) half
                const((3, hid, hid)),   # e2e / e2n / n2n weights
                const((4, hid)),        # packed hid-sized biases
                const((dim, dim)),      # out weight (starter part)
                const((hid, dim)),      # out weight (t part)
                const((1, dim)),        # out bias
            ],
            out_specs=pl.BlockSpec((tb, dim), lambda b, sref: (b, 0)),
        ),
        compiler_params=pltpu.CompilerParams(
            dimension_semantics=("parallel",),
            vmem_limit_bytes=32 * 1024 * 1024),
        cost_estimate=pl.CostEstimate(flops=flops,
                                      transcendentals=transcendentals,
                                      bytes_accessed=bytes_accessed),
    )(i_arr, x, adj2, packed["wx"], packed["we"], packed["whh"],
      packed["bh"], packed["wo1"], packed["wo2"], packed["bo"])
    return out


def _init_linear(key, out_f, in_f):
    # PyTorch nn.Linear default init: U(-1/sqrt(in), 1/sqrt(in))
    kw, kb = jax.random.split(key)
    bound = 1.0 / np.sqrt(in_f)
    w = jax.random.uniform(kw, (out_f, in_f), jnp.float32, -bound, bound)
    b = jax.random.uniform(kb, (out_f,), jnp.float32, -bound, bound)
    return w, b


def _reference_forward(x, adj_col, i, params):
    # Pure-JAX reference of the PyTorch forward (chunk loop collapsed).
    starter = x[:, i, :]
    ender = jnp.broadcast_to(starter[:, None, :], x.shape)
    c_x = jnp.concatenate([x, ender], axis=2)
    h = jax.nn.relu(c_x @ params["n2e_w"].T + params["n2e_b"])
    h = jax.nn.relu(h @ params["e2e_w"].T + params["e2e_b"])
    h = h * adj_col[None, :, None]
    s = jnp.sum(h, axis=1)
    t = jax.nn.relu(s @ params["e2n_w"].T + params["e2n_b"])
    t = jax.nn.relu(t @ params["n2n_w"].T + params["n2n_b"])
    logits = jnp.concatenate([starter, t], axis=-1) @ params["out_w"].T + params["out_b"]
    return jax.nn.log_softmax(logits, axis=1)


if __name__ == "__main__":
    dim, hid = 4, 32
    B, N = 16, 16           # B=16, tb=8 -> grid=(2,) exercises the batch grid
    i = 3

    key = jax.random.PRNGKey(0)
    kx, kadj, k1, k2, k3, k4, k5 = jax.random.split(key, 7)

    x = jax.random.normal(kx, (B, N, dim), jnp.float32)
    adj_col = jax.random.uniform(kadj, (N,), jnp.float32)

    params = {}
    params["n2e_w"], params["n2e_b"] = _init_linear(k1, hid, 2 * dim)
    params["e2e_w"], params["e2e_b"] = _init_linear(k2, hid, hid)
    params["e2n_w"], params["e2n_b"] = _init_linear(k3, hid, hid)
    params["n2n_w"], params["n2n_b"] = _init_linear(k4, hid, hid)
    params["out_w"], params["out_b"] = _init_linear(k5, dim, dim + hid)

    packed = pack_params(params)     # one-time packing, not in the hot path

    out = io_b_voter_forward(x, adj_col, i, packed, num=1, node_size=8, tb=8)
    out = jax.block_until_ready(out)

    ref = _reference_forward(x, adj_col, i, params)
    assert out.shape == (B, dim)
    assert np.allclose(np.asarray(out), np.asarray(ref), atol=1e-5, rtol=1e-5)
    print("KERNEL_OK")
</pallas_src>

<mosaic_0001>
module attributes {stable_mosaic.version = 11 : i64} {
  func.func @_io_b_voter_kernel(%arg0: i32, %arg1: memref<1xi32, #tpu.memory_space<smem>>, %arg2: memref<8x16x4xf32, #tpu.memory_space<vmem>>, %arg3: memref<16x1xf32, #tpu.memory_space<vmem>>, %arg4: memref<4x32xf32, #tpu.memory_space<vmem>>, %arg5: memref<4x32xf32, #tpu.memory_space<vmem>>, %arg6: memref<3x32x32xf32, #tpu.memory_space<vmem>>, %arg7: memref<4x32xf32, #tpu.memory_space<vmem>>, %arg8: memref<4x4xf32, #tpu.memory_space<vmem>>, %arg9: memref<32x4xf32, #tpu.memory_space<vmem>>, %arg10: memref<1x4xf32, #tpu.memory_space<vmem>>, %arg11: memref<8x4xf32, #tpu.memory_space<vmem>>) attributes {dimension_semantics = [#tpu.dimension_semantics<parallel>], iteration_bounds = array<i64: 2>, scalar_prefetch = 1 : i64, scratch_operands = 0 : i64, tpu.core_type = #tpu.core_type<tc>, window_params = [{transform_indices = @transform_0, window_bounds = array<i64: 8, 16, 4>}, {pipeline_mode = #tpu.pipeline_mode<synchronous>, transform_indices = @transform_1, window_bounds = array<i64: 16, 1>}, {pipeline_mode = #tpu.pipeline_mode<synchronous>, transform_indices = @transform_2, window_bounds = array<i64: 4, 32>}, {pipeline_mode = #tpu.pipeline_mode<synchronous>, transform_indices = @transform_3, window_bounds = array<i64: 4, 32>}, {pipeline_mode = #tpu.pipeline_mode<synchronous>, transform_indices = @transform_4, window_bounds = array<i64: 3, 32, 32>}, {pipeline_mode = #tpu.pipeline_mode<synchronous>, transform_indices = @transform_5, window_bounds = array<i64: 4, 32>}, {pipeline_mode = #tpu.pipeline_mode<synchronous>, transform_indices = @transform_6, window_bounds = array<i64: 4, 4>}, {pipeline_mode = #tpu.pipeline_mode<synchronous>, transform_indices = @transform_7, window_bounds = array<i64: 32, 4>}, {pipeline_mode = #tpu.pipeline_mode<synchronous>, transform_indices = @transform_8, window_bounds = array<i64: 1, 4>}, {transform_indices = @transform_9, window_bounds = array<i64: 8, 4>}]} {
    %c0 = arith.constant 0 : index
    %c0_0 = arith.constant 0 : index
    %c0_1 = arith.constant 0 : index
    %0 = vector.load %arg2[%c0, %c0_0, %c0_1] : memref<8x16x4xf32, #tpu.memory_space<vmem>>, vector<8x16x4xf32>
    %1 = tpu.iota {dimensions = array<i32: 0>} : vector<16x1xi32>
    %c0_2 = arith.constant 0 : index
    %2 = memref.load %arg1[%c0_2] : memref<1xi32, #tpu.memory_space<smem>>
    %3 = vector.broadcast %2 : i32 to vector<16x1xi32>
    %4 = arith.cmpi eq, %1, %3 : vector<16x1xi32>
    %5 = arith.extui %4 : vector<16x1xi1> to vector<16x1xi32>
    %6 = arith.sitofp %5 : vector<16x1xi32> to vector<16x1xf32>
    %7 = vector.shape_cast %6 : vector<16x1xf32> to vector<1x16x1xf32>
    %8 = vector.broadcast %7 : vector<1x16x1xf32> to vector<8x16x4xf32>
    %9 = arith.mulf %0, %8 : vector<8x16x4xf32>
    %cst = arith.constant dense<0.000000e+00> : vector<8x4xf32>
    %10 = vector.multi_reduction <add>, %9, %cst [1] : vector<8x16x4xf32> to vector<8x4xf32>
    %11 = vector.shape_cast %0 : vector<8x16x4xf32> to vector<128x4xf32>
    %c0_3 = arith.constant 0 : index
    %c0_4 = arith.constant 0 : index
    %12 = vector.load %arg4[%c0_3, %c0_4] : memref<4x32xf32, #tpu.memory_space<vmem>>, vector<4x32xf32>
    %cst_5 = arith.constant dense<0.000000e+00> : vector<128x32xf32>
    %13 = tpu.matmul %11, %12, %cst_5 {dimension_numbers = #tpu.dot_dimension_numbers<[1], [0], [0], [1], [0, 0, 1, 1], [], []>} : vector<128x4xf32>, vector<4x32xf32>, vector<128x32xf32> -> vector<128x32xf32>
    %c0_6 = arith.constant 0 : index
    %c0_7 = arith.constant 0 : index
    %14 = vector.load %arg5[%c0_6, %c0_7] : memref<4x32xf32, #tpu.memory_space<vmem>>, vector<4x32xf32>
    %cst_8 = arith.constant dense<0.000000e+00> : vector<8x32xf32>
    %15 = tpu.matmul %10, %14, %cst_8 {dimension_numbers = #tpu.dot_dimension_numbers<[1], [0], [0], [1], [0, 0, 1, 1], [], []>} : vector<8x4xf32>, vector<4x32xf32>, vector<8x32xf32> -> vector<8x32xf32>
    %16 = vector.shape_cast %13 : vector<128x32xf32> to vector<8x16x32xf32>
    %17 = vector.shape_cast %15 : vector<8x32xf32> to vector<8x1x32xf32>
    %18 = vector.broadcast %17 : vector<8x1x32xf32> to vector<8x16x32xf32>
    %19 = arith.addf %16, %18 : vector<8x16x32xf32>
    %c0_9 = arith.constant 0 : index
    %c0_10 = arith.constant 0 : index
    %20 = vector.load %arg7[%c0_9, %c0_10] : memref<4x32xf32, #tpu.memory_space<vmem>>, vector<1x32xf32>
    %21 = vector.shape_cast %20 : vector<1x32xf32> to vector<1x1x32xf32>
    %22 = vector.broadcast %21 : vector<1x1x32xf32> to vector<8x16x32xf32>
    %23 = arith.addf %19, %22 : vector<8x16x32xf32>
    %cst_11 = arith.constant 0.000000e+00 : f32
    %24 = vector.broadcast %cst_11 : f32 to vector<8x16x32xf32>
    %25 = arith.maximumf %23, %24 : vector<8x16x32xf32>
    %26 = vector.shape_cast %25 : vector<8x16x32xf32> to vector<128x32xf32>
    %c0_12 = arith.constant 0 : index
    %c0_13 = arith.constant 0 : index
    %c0_14 = arith.constant 0 : index
    %27 = vector.load %arg6[%c0_12, %c0_13, %c0_14] : memref<3x32x32xf32, #tpu.memory_space<vmem>>, vector<1x32x32xf32>
    %28 = vector.shape_cast %27 : vector<1x32x32xf32> to vector<32x32xf32>
    %cst_15 = arith.constant dense<0.000000e+00> : vector<128x32xf32>
    %29 = tpu.matmul %26, %28, %cst_15 {dimension_numbers = #tpu.dot_dimension_numbers<[1], [0], [0], [1], [0, 0, 1, 1], [], []>} : vector<128x32xf32>, vector<32x32xf32>, vector<128x32xf32> -> vector<128x32xf32>
    %c1 = arith.constant 1 : index
    %c0_16 = arith.constant 0 : index
    %30 = vector.load %arg7[%c1, %c0_16] : memref<4x32xf32, #tpu.memory_space<vmem>>, vector<1x32xf32>
    %31 = vector.broadcast %30 : vector<1x32xf32> to vector<128x32xf32>
    %32 = arith.addf %29, %31 : vector<128x32xf32>
    %cst_17 = arith.constant 0.000000e+00 : f32
    %33 = vector.broadcast %cst_17 : f32 to vector<128x32xf32>
    %34 = arith.maximumf %32, %33 : vector<128x32xf32>
    %c0_18 = arith.constant 0 : index
    %c0_19 = arith.constant 0 : index
    %35 = vector.load %arg3[%c0_18, %c0_19] : memref<16x1xf32, #tpu.memory_space<vmem>>, vector<16x1xf32>
    %36 = vector.shape_cast %34 : vector<128x32xf32> to vector<8x16x32xf32>
    %37 = vector.shape_cast %35 : vector<16x1xf32> to vector<1x16x1xf32>
    %38 = vector.broadcast %37 : vector<1x16x1xf32> to vector<8x16x32xf32>
    %39 = arith.mulf %36, %38 : vector<8x16x32xf32>
    %cst_20 = arith.constant dense<0.000000e+00> : vector<8x32xf32>
    %40 = vector.multi_reduction <add>, %39, %cst_20 [1] : vector<8x16x32xf32> to vector<8x32xf32>
    %c1_21 = arith.constant 1 : index
    %c0_22 = arith.constant 0 : index
    %c0_23 = arith.constant 0 : index
    %41 = vector.load %arg6[%c1_21, %c0_22, %c0_23] : memref<3x32x32xf32, #tpu.memory_space<vmem>>, vector<1x32x32xf32>
    %42 = vector.shape_cast %41 : vector<1x32x32xf32> to vector<32x32xf32>
    %cst_24 = arith.constant dense<0.000000e+00> : vector<8x32xf32>
    %43 = tpu.matmul %40, %42, %cst_24 {dimension_numbers = #tpu.dot_dimension_numbers<[1], [0], [0], [1], [0, 0, 1, 1], [], []>} : vector<8x32xf32>, vector<32x32xf32>, vector<8x32xf32> -> vector<8x32xf32>
    %c2 = arith.constant 2 : index
    %c0_25 = arith.constant 0 : index
    %44 = vector.load %arg7[%c2, %c0_25] : memref<4x32xf32, #tpu.memory_space<vmem>>, vector<1x32xf32>
    %45 = vector.broadcast %44 : vector<1x32xf32> to vector<8x32xf32>
    %46 = arith.addf %43, %45 : vector<8x32xf32>
    %cst_26 = arith.constant 0.000000e+00 : f32
    %47 = vector.broadcast %cst_26 : f32 to vector<8x32xf32>
    %48 = arith.maximumf %46, %47 : vector<8x32xf32>
    %c2_27 = arith.constant 2 : index
    %c0_28 = arith.constant 0 : index
    %c0_29 = arith.constant 0 : index
    %49 = vector.load %arg6[%c2_27, %c0_28, %c0_29] : memref<3x32x32xf32, #tpu.memory_space<vmem>>, vector<1x32x32xf32>
    %50 = vector.shape_cast %49 : vector<1x32x32xf32> to vector<32x32xf32>
    %cst_30 = arith.constant dense<0.000000e+00> : vector<8x32xf32>
    %51 = tpu.matmul %48, %50, %cst_30 {dimension_numbers = #tpu.dot_dimension_numbers<[1], [0], [0], [1], [0, 0, 1, 1], [], []>} : vector<8x32xf32>, vector<32x32xf32>, vector<8x32xf32> -> vector<8x32xf32>
    %c3 = arith.constant 3 : index
    %c0_31 = arith.constant 0 : index
    %52 = vector.load %arg7[%c3, %c0_31] : memref<4x32xf32, #tpu.memory_space<vmem>>, vector<1x32xf32>
    %53 = vector.broadcast %52 : vector<1x32xf32> to vector<8x32xf32>
    %54 = arith.addf %51, %53 : vector<8x32xf32>
    %cst_32 = arith.constant 0.000000e+00 : f32
    %55 = vector.broadcast %cst_32 : f32 to vector<8x32xf32>
    %56 = arith.maximumf %54, %55 : vector<8x32xf32>
    %c0_33 = arith.constant 0 : index
    %c0_34 = arith.constant 0 : index
    %57 = vector.load %arg8[%c0_33, %c0_34] : memref<4x4xf32, #tpu.memory_space<vmem>>, vector<4x4xf32>
    %cst_35 = arith.constant dense<0.000000e+00> : vector<8x4xf32>
    %58 = tpu.matmul %10, %57, %cst_35 {dimension_numbers = #tpu.dot_dimension_numbers<[1], [0], [0], [1], [0, 0, 1, 1], [], []>} : vector<8x4xf32>, vector<4x4xf32>, vector<8x4xf32> -> vector<8x4xf32>
    %c0_36 = arith.constant 0 : index
    %c0_37 = arith.constant 0 : index
    %59 = vector.load %arg9[%c0_36, %c0_37] : memref<32x4xf32, #tpu.memory_space<vmem>>, vector<32x4xf32>
    %cst_38 = arith.constant dense<0.000000e+00> : vector<8x4xf32>
    %60 = tpu.matmul %56, %59, %cst_38 {dimension_numbers = #tpu.dot_dimension_numbers<[1], [0], [0], [1], [0, 0, 1, 1], [], []>} : vector<8x32xf32>, vector<32x4xf32>, vector<8x4xf32> -> vector<8x4xf32>
    %61 = arith.addf %58, %60 : vector<8x4xf32>
    %c0_39 = arith.constant 0 : index
    %c0_40 = arith.constant 0 : index
    %62 = vector.load %arg10[%c0_39, %c0_40] : memref<1x4xf32, #tpu.memory_space<vmem>>, vector<1x4xf32>
    %63 = vector.broadcast %62 : vector<1x4xf32> to vector<8x4xf32>
    %64 = arith.addf %61, %63 : vector<8x4xf32>
    %cst_41 = arith.constant dense<0xFF800000> : vector<8xf32>
    %65 = vector.multi_reduction <maximumf>, %64, %cst_41 [1] : vector<8x4xf32> to vector<8xf32>
    %66 = vector.shape_cast %65 : vector<8xf32> to vector<8x1xf32>
    %67 = vector.broadcast %66 : vector<8x1xf32> to vector<8x4xf32>
    %68 = arith.subf %64, %67 : vector<8x4xf32>
    %69 = math.exp %68 : vector<8x4xf32>
    %cst_42 = arith.constant dense<0.000000e+00> : vector<8xf32>
    %70 = vector.multi_reduction <add>, %69, %cst_42 [1] : vector<8x4xf32> to vector<8xf32>
    %71 = vector.shape_cast %70 : vector<8xf32> to vector<8x1xf32>
    %72 = math.log %71 : vector<8x1xf32>
    %73 = vector.broadcast %72 : vector<8x1xf32> to vector<8x4xf32>
    %74 = arith.subf %68, %73 : vector<8x4xf32>
    %c0_43 = arith.constant 0 : index
    %c0_44 = arith.constant 0 : index
    %75 = vector.load %arg11[%c0_43, %c0_44] : memref<8x4xf32, #tpu.memory_space<vmem>>, vector<8x4xf32>
    tpu.vector_store %arg11[%c0_43, %c0_44], %74 {strides = array<i32>} : memref<8x4xf32, #tpu.memory_space<vmem>>, vector<8x4xf32>,
    return
  }
  func.func @transform_0(%arg0: i32, %arg1: memref<1xi32, #tpu.memory_space<smem>>) -> (i32, i32, i32) {
    %c0_i32 = arith.constant 0 : i32
    %c0_i32_0 = arith.constant 0 : i32
    %c0_i32_1 = arith.constant 0 : i32
    return %arg0, %c0_i32, %c0_i32_0 : i32, i32, i32
  }
  func.func @transform_1(%arg0: i32, %arg1: memref<1xi32, #tpu.memory_space<smem>>) -> (i32, i32) {
    %c0_i32 = arith.constant 0 : i32
    %c0_i32_0 = arith.constant 0 : i32
    %c0_i32_1 = arith.constant 0 : i32
    return %c0_i32, %c0_i32_0 : i32, i32
  }
  func.func @transform_2(%arg0: i32, %arg1: memref<1xi32, #tpu.memory_space<smem>>) -> (i32, i32) {
    %c0_i32 = arith.constant 0 : i32
    %c0_i32_0 = arith.constant 0 : i32
    %c0_i32_1 = arith.constant 0 : i32
    return %c0_i32, %c0_i32_0 : i32, i32
  }
  func.func @transform_3(%arg0: i32, %arg1: memref<1xi32, #tpu.memory_space<smem>>) -> (i32, i32) {
    %c0_i32 = arith.constant 0 : i32
    %c0_i32_0 = arith.constant 0 : i32
    %c0_i32_1 = arith.constant 0 : i32
    return %c0_i32, %c0_i32_0 : i32, i32
  }
  func.func @transform_4(%arg0: i32, %arg1: memref<1xi32, #tpu.memory_space<smem>>) -> (i32, i32, i32) {
    %c0_i32 = arith.constant 0 : i32
    %c0_i32_0 = arith.constant 0 : i32
    %c0_i32_1 = arith.constant 0 : i32
    %c0_i32_2 = arith.constant 0 : i32
    return %c0_i32, %c0_i32_0, %c0_i32_1 : i32, i32, i32
  }
  func.func @transform_5(%arg0: i32, %arg1: memref<1xi32, #tpu.memory_space<smem>>) -> (i32, i32) {
    %c0_i32 = arith.constant 0 : i32
    %c0_i32_0 = arith.constant 0 : i32
    %c0_i32_1 = arith.constant 0 : i32
    return %c0_i32, %c0_i32_0 : i32, i32
  }
  func.func @transform_6(%arg0: i32, %arg1: memref<1xi32, #tpu.memory_space<smem>>) -> (i32, i32) {
    %c0_i32 = arith.constant 0 : i32
    %c0_i32_0 = arith.constant 0 : i32
    %c0_i32_1 = arith.constant 0 : i32
    return %c0_i32, %c0_i32_0 : i32, i32
  }
  func.func @transform_7(%arg0: i32, %arg1: memref<1xi32, #tpu.memory_space<smem>>) -> (i32, i32) {
    %c0_i32 = arith.constant 0 : i32
    %c0_i32_0 = arith.constant 0 : i32
    %c0_i32_1 = arith.constant 0 : i32
    return %c0_i32, %c0_i32_0 : i32, i32
  }
  func.func @transform_8(%arg0: i32, %arg1: memref<1xi32, #tpu.memory_space<smem>>) -> (i32, i32) {
    %c0_i32 = arith.constant 0 : i32
    %c0_i32_0 = arith.constant 0 : i32
    %c0_i32_1 = arith.constant 0 : i32
    return %c0_i32, %c0_i32_0 : i32, i32
  }
  func.func @transform_9(%arg0: i32, %arg1: memref<1xi32, #tpu.memory_space<smem>>) -> (i32, i32) {
    %c0_i32 = arith.constant 0 : i32
    %c0_i32_0 = arith.constant 0 : i32
    return %arg0, %c0_i32 : i32, i32
  }
}

</mosaic_0001>

<llo_original>
// kernel: tpu_custom_call.1
$region0: #{tpu_custom_call.1}
  #allocation0 [shape = 'u32[]', space=smem, size = 0x4, offset = 0x4, fixed_abs, tag = 'smem constant byte address 0x4 - core index']
  #allocation1 [shape = 'u32[144,128]{1,0:T(1,128)}', space=vmem, size = 0x12000, scoped, tag = 'internal scratch']
  #allocation2 [shape = 's32[1]{0}', space=sflag, size = 0x4, scoped, tag = 'scoped memory for tpu_custom_call.1']
  #allocation3 [shape = 's32[1]{0:T(128)S(6)}', space=smem, size = 0x200, scoped, tag = 'prefetched SMEM operand 0']
  %s0 = inlined_call_operand.<no memory space> [shape: s32[1], index: 0, kind: input, shape index: {}]
  %s1 = inlined_call_operand.vmem [shape: f32[16,16,4], index: 1, kind: input, shape index: {}]
  %s2 = inlined_call_operand.vmem [shape: f32[16,1], index: 2, kind: input, shape index: {}]
  %s3 = inlined_call_operand.vmem [shape: f32[4,32], index: 3, kind: input, shape index: {}]
  %s4 = inlined_call_operand.vmem [shape: f32[4,32], index: 4, kind: input, shape index: {}]
  %s5 = inlined_call_operand.vmem [shape: f32[3,32,32], index: 5, kind: input, shape index: {}]
  %s6 = inlined_call_operand.vmem [shape: f32[4,32], index: 6, kind: input, shape index: {}]
  %s7 = inlined_call_operand.vmem [shape: f32[4,4], index: 7, kind: input, shape index: {}]
  %s8 = inlined_call_operand.vmem [shape: f32[32,4], index: 8, kind: input, shape index: {}]
  %s9 = inlined_call_operand.vmem [shape: f32[1,4], index: 9, kind: input, shape index: {}]
  %s10 = inlined_call_operand.vmem [shape: f32[16,4], index: 10, kind: output, shape index: {}]
  %s11 = sld [smem:[#allocation0]]
  $region69: #{tpu_custom_call.1} parent=0
    _
  %s13 = ssub.s32 1, %s11
  %s14 = scalar_select 0, %s13, %s11
  %15 = sst [smem:[#allocation3]] %s0
  loop: start=0, step=1, limit=4
  $region2: #{tpu_custom_call.1} parent=0 // loop_pre_header
    _
  $region3: #{tpu_custom_call.1} parent=0 // loop_header
    %s17 = sphi 0, %s21
    %p18 = scmp.ge.s32.totalorder %s17, 4
    %s27 = sphi 0, %s29
    %s30 = sphi 0, %s27
    %s31 = sphi 0, %s30
    %s47 = sphi 0, %s31
    %s51 = sphi 0, %s51
    %s53 = sphi 0, %s51
    %s54 = sphi 0, %s53
    %s68 = sphi 0, %s54
    %s72 = sphi 0, %s72
    %s74 = sphi 0, %s72
    %s75 = sphi 0, %s74
    %s89 = sphi 0, %s75
    %s93 = sphi 0, %s93
    %s95 = sphi 0, %s93
    %s96 = sphi 0, %s95
    %s110 = sphi 0, %s96
    %s114 = sphi 0, %s114
    %s116 = sphi 0, %s114
    %s117 = sphi 0, %s116
    %s131 = sphi 0, %s117
    %s135 = sphi 0, %s135
    %s137 = sphi 0, %s135
    %s138 = sphi 0, %s137
    %s152 = sphi 0, %s138
    %s156 = sphi 0, %s156
    %s158 = sphi 0, %s156
    %s159 = sphi 0, %s158
    %s173 = sphi 0, %s159
    %s177 = sphi 0, %s177
    %s179 = sphi 0, %s177
    %s180 = sphi 0, %s179
    %s194 = sphi 0, %s180
    %s198 = sphi 0, %s198
    %s200 = sphi 0, %s198
    %s201 = sphi 0, %s200
    %s215 = sphi 0, %s201
    %s221 = sphi 0, %s223
    %s224 = sphi 0, %s221
    %s225 = sphi 0, %s224
    %s241 = sphi 0, %s225
  $region4: #{tpu_custom_call.1} parent=0 // loop_header_branch
    %20 = sbr.rel (%p18) target = $region8
  $region5: #{tpu_custom_call.1} parent=0 // loop_body
    %s22 = ssub.s32 %s17, 1
    %s23 = ssub.s32 %s17, 2
    %s24 = sadd.s32 %s17, 1
    %s25 = ssub.s32 %s17, %s24
    %p26 = scmp.eq.s32.totalorder %s25, 0
    %s28 = sadd.s32 %s27, 1
    %s29 = scalar_select %p26, %s27, %s28
    %p32 = pneg %p26
    %p33 = scmp.eq.s32.totalorder %s17, 1
    %p34 = por %p32, %p33
    %p35 = scmp.ne.s32.totalorder %s27, %s30
    %p36 = scmp.eq.s32.totalorder %s17, 0
    %p37 = por %p35, %p36
    %p38 = scmp.ne.s32.totalorder %s27, %s30
    %p39 = scmp.eq.s32.totalorder %s22, 1
    %p40 = por %p38, %p39
    %p41 = scmp.ne.s32.totalorder %s30, %s31
    %p42 = scmp.eq.s32.totalorder %s22, 0
    %p43 = por %p41, %p42
    %p44 = scmp.ne.s32.totalorder %s30, %s31
    %p45 = scmp.eq.s32.totalorder %s23, 1
    %p46 = por %p44, %p45
    %p48 = scmp.ne.s32.totalorder %s31, %s47
    %p49 = scmp.eq.s32.totalorder %s23, 0
    %p50 = por %p48, %p49
    %s52 = sadd.s32 %s51, 1
    %p55 = scmp.eq.s32.totalorder %s17, 1
    %p56 = scmp.ne.s32.totalorder %s51, %s53
    %p57 = scmp.eq.s32.totalorder %s17, 0
    %p58 = por %p56, %p57
    %p59 = scmp.ne.s32.totalorder %s51, %s53
    %p60 = scmp.eq.s32.totalorder %s22, 1
    %p61 = por %p59, %p60
    %p62 = scmp.ne.s32.totalorder %s53, %s54
    %p63 = scmp.eq.s32.totalorder %s22, 0
    %p64 = por %p62, %p63
    %p65 = scmp.ne.s32.totalorder %s53, %s54
    %p66 = scmp.eq.s32.totalorder %s23, 1
    %p67 = por %p65, %p66
    %p69 = scmp.ne.s32.totalorder %s54, %s68
    %p70 = scmp.eq.s32.totalorder %s23, 0
    %p71 = por %p69, %p70
    %s73 = sadd.s32 %s72, 1
    %p76 = scmp.eq.s32.totalorder %s17, 1
    %p77 = scmp.ne.s32.totalorder %s72, %s74
    %p78 = scmp.eq.s32.totalorder %s17, 0
    %p79 = por %p77, %p78
    %p80 = scmp.ne.s32.totalorder %s72, %s74
    %p81 = scmp.eq.s32.totalorder %s22, 1
    %p82 = por %p80, %p81
    %p83 = scmp.ne.s32.totalorder %s74, %s75
    %p84 = scmp.eq.s32.totalorder %s22, 0
    %p85 = por %p83, %p84
    %p86 = scmp.ne.s32.totalorder %s74, %s75
    %p87 = scmp.eq.s32.totalorder %s23, 1
    %p88 = por %p86, %p87
    %p90 = scmp.ne.s32.totalorder %s75, %s89
    %p91 = scmp.eq.s32.totalorder %s23, 0
    %p92 = por %p90, %p91
    %s94 = sadd.s32 %s93, 1
    %p97 = scmp.eq.s32.totalorder %s17, 1
    %p98 = scmp.ne.s32.totalorder %s93, %s95
    %p99 = scmp.eq.s32.totalorder %s17, 0
    %p100 = por %p98, %p99
    %p101 = scmp.ne.s32.totalorder %s93, %s95
    %p102 = scmp.eq.s32.totalorder %s22, 1
    %p103 = por %p101, %p102
    %p104 = scmp.ne.s32.totalorder %s95, %s96
    %p105 = scmp.eq.s32.totalorder %s22, 0
    %p106 = por %p104, %p105
    %p107 = scmp.ne.s32.totalorder %s95, %s96
    %p108 = scmp.eq.s32.totalorder %s23, 1
    %p109 = por %p107, %p108
    %p111 = scmp.ne.s32.totalorder %s96, %s110
    %p112 = scmp.eq.s32.totalorder %s23, 0
    %p113 = por %p111, %p112
    %s115 = sadd.s32 %s114, 1
    %p118 = scmp.eq.s32.totalorder %s17, 1
    %p119 = scmp.ne.s32.totalorder %s114, %s116
    %p120 = scmp.eq.s32.totalorder %s17, 0
    %p121 = por %p119, %p120
    %p122 = scmp.ne.s32.totalorder %s114, %s116
    %p123 = scmp.eq.s32.totalorder %s22, 1
    %p124 = por %p122, %p123
    %p125 = scmp.ne.s32.totalorder %s116, %s117
    %p126 = scmp.eq.s32.totalorder %s22, 0
    %p127 = por %p125, %p126
    %p128 = scmp.ne.s32.totalorder %s116, %s117
    %p129 = scmp.eq.s32.totalorder %s23, 1
    %p130 = por %p128, %p129
    %p132 = scmp.ne.s32.totalorder %s117, %s131
    %p133 = scmp.eq.s32.totalorder %s23, 0
    %p134 = por %p132, %p133
    %s136 = sadd.s32 %s135, 1
    %p139 = scmp.eq.s32.totalorder %s17, 1
    %p140 = scmp.ne.s32.totalorder %s135, %s137
    %p141 = scmp.eq.s32.totalorder %s17, 0
    %p142 = por %p140, %p141
    %p143 = scmp.ne.s32.totalorder %s135, %s137
    %p144 = scmp.eq.s32.totalorder %s22, 1
    %p145 = por %p143, %p144
    %p146 = scmp.ne.s32.totalorder %s137, %s138
    %p147 = scmp.eq.s32.totalorder %s22, 0
    %p148 = por %p146, %p147
    %p149 = scmp.ne.s32.totalorder %s137, %s138
    %p150 = scmp.eq.s32.totalorder %s23, 1
    %p151 = por %p149, %p150
    %p153 = scmp.ne.s32.totalorder %s138, %s152
    %p154 = scmp.eq.s32.totalorder %s23, 0
    %p155 = por %p153, %p154
    %s157 = sadd.s32 %s156, 1
    %p160 = scmp.eq.s32.totalorder %s17, 1
    %p161 = scmp.ne.s32.totalorder %s156, %s158
    %p162 = scmp.eq.s32.totalorder %s17, 0
    %p163 = por %p161, %p162
    %p164 = scmp.ne.s32.totalorder %s156, %s158
    %p165 = scmp.eq.s32.totalorder %s22, 1
    %p166 = por %p164, %p165
    %p167 = scmp.ne.s32.totalorder %s158, %s159
    %p168 = scmp.eq.s32.totalorder %s22, 0
    %p169 = por %p167, %p168
    %p170 = scmp.ne.s32.totalorder %s158, %s159
    %p171 = scmp.eq.s32.totalorder %s23, 1
    %p172 = por %p170, %p171
    %p174 = scmp.ne.s32.totalorder %s159, %s173
    %p175 = scmp.eq.s32.totalorder %s23, 0
    %p176 = por %p174, %p175
    %s178 = sadd.s32 %s177, 1
    %p181 = scmp.eq.s32.totalorder %s17, 1
    %p182 = scmp.ne.s32.totalorder %s177, %s179
    %p183 = scmp.eq.s32.totalorder %s17, 0
    %p184 = por %p182, %p183
    %p185 = scmp.ne.s32.totalorder %s177, %s179
    %p186 = scmp.eq.s32.totalorder %s22, 1
    %p187 = por %p185, %p186
    %p188 = scmp.ne.s32.totalorder %s179, %s180
    %p189 = scmp.eq.s32.totalorder %s22, 0
    %p190 = por %p188, %p189
    %p191 = scmp.ne.s32.totalorder %s179, %s180
    %p192 = scmp.eq.s32.totalorder %s23, 1
    %p193 = por %p191, %p192
    %p195 = scmp.ne.s32.totalorder %s180, %s194
    %p196 = scmp.eq.s32.totalorder %s23, 0
    %p197 = por %p195, %p196
    %s199 = sadd.s32 %s198, 1
    %p202 = scmp.eq.s32.totalorder %s17, 1
    %p203 = scmp.ne.s32.totalorder %s198, %s200
    %p204 = scmp.eq.s32.totalorder %s17, 0
    %p205 = por %p203, %p204
    %p206 = scmp.ne.s32.totalorder %s198, %s200
    %p207 = scmp.eq.s32.totalorder %s22, 1
    %p208 = por %p206, %p207
    %p209 = scmp.ne.s32.totalorder %s200, %s201
    %p210 = scmp.eq.s32.totalorder %s22, 0
    %p211 = por %p209, %p210
    %p212 = scmp.ne.s32.totalorder %s200, %s201
    %p213 = scmp.eq.s32.totalorder %s23, 1
    %p214 = por %p212, %p213
    %p216 = scmp.ne.s32.totalorder %s201, %s215
    %p217 = scmp.eq.s32.totalorder %s23, 0
    %p218 = por %p216, %p217
    %s219 = ssub.s32 %s17, %s24
    %p220 = scmp.eq.s32.totalorder %s219, 0
    %s222 = sadd.s32 %s221, 1
    %s223 = scalar_select %p220, %s221, %s222
    %p226 = pneg %p220
    %p227 = scmp.eq.s32.totalorder %s17, 1
    %p228 = por %p226, %p227
    %p229 = scmp.ne.s32.totalorder %s221, %s224
    %p230 = scmp.eq.s32.totalorder %s17, 0
    %p231 = por %p229, %p230
    %p232 = scmp.ne.s32.totalorder %s221, %s224
    %p233 = scmp.eq.s32.totalorder %s22, 1
    %p234 = por %p232, %p233
    %p235 = scmp.ne.s32.totalorder %s224, %s225
    %p236 = scmp.eq.s32.totalorder %s22, 0
    %p237 = por %p235, %p236
    %p238 = scmp.ne.s32.totalorder %s224, %s225
    %p239 = scmp.eq.s32.totalorder %s23, 1
    %p240 = por %p238, %p239
    %p242 = scmp.ne.s32.totalorder %s225, %s241
    %p243 = scmp.eq.s32.totalorder %s23, 0
    %p244 = por %p242, %p243
    %p245 = scmp.le.s32.totalorder 1, %s17
    %p246 = scmp.lt.s32.totalorder %s17, 3
    %p247 = pnand %p245, %p246
    %p248 = pneg %p247
    // Predicated region
    $region9: #{tpu_custom_call.1} parent=5 // pred_check
      _
    $region10: #{tpu_custom_call.1} parent=5 // pred_check_branch
      %250 = sbr.rel (%p247) target = $region12
    $region11: #{tpu_custom_call.1} parent=5 // pred_region
      %s251 = ssub.s32 %s17, 1
      // Predicated region
      $region13: #{tpu_custom_call.1} parent=11 // pred_check
        %p252 = pneg %p64
      $region14: #{tpu_custom_call.1} parent=11 // pred_check_branch
        %254 = sbr.rel (%p252) target = $region16
      $region15: #{tpu_custom_call.1} parent=11 // pred_region
        _
      $region16: #{tpu_custom_call.1} parent=11 // pred_fallthru
        _
      // Predicated region
      $region17: #{tpu_custom_call.1} parent=11 // pred_check
        %p255 = pneg %p85
      $region18: #{tpu_custom_call.1} parent=11 // pred_check_branch
        %257 = sbr.rel (%p255) target = $region20
      $region19: #{tpu_custom_call.1} parent=11 // pred_region
        _
      $region20: #{tpu_custom_call.1} parent=11 // pred_fallthru
        _
      // Predicated region
      $region21: #{tpu_custom_call.1} parent=11 // pred_check
        %p258 = pneg %p106
      $region22: #{tpu_custom_call.1} parent=11 // pred_check_branch
        %260 = sbr.rel (%p258) target = $region24
      $region23: #{tpu_custom_call.1} parent=11 // pred_region
        _
      $region24: #{tpu_custom_call.1} parent=11 // pred_fallthru
        _
      // Predicated region
      $region25: #{tpu_custom_call.1} parent=11 // pred_check
        %p261 = pneg %p127
      $region26: #{tpu_custom_call.1} parent=11 // pred_check_branch
        %263 = sbr.rel (%p261) target = $region28
      $region27: #{tpu_custom_call.1} parent=11 // pred_region
        _
      $region28: #{tpu_custom_call.1} parent=11 // pred_fallthru
        _
      // Predicated region
      $region29: #{tpu_custom_call.1} parent=11 // pred_check
        %p264 = pneg %p148
      $region30: #{tpu_custom_call.1} parent=11 // pred_check_branch
        %266 = sbr.rel (%p264) target = $region32
      $region31: #{tpu_custom_call.1} parent=11 // pred_region
        _
      $region32: #{tpu_custom_call.1} parent=11 // pred_fallthru
        _
      // Predicated region
      $region33: #{tpu_custom_call.1} parent=11 // pred_check
        %p267 = pneg %p169
      $region34: #{tpu_custom_call.1} parent=11 // pred_check_branch
        %269 = sbr.rel (%p267) target = $region36
      $region35: #{tpu_custom_call.1} parent=11 // pred_region
        _
      $region36: #{tpu_custom_call.1} parent=11 // pred_fallthru
        _
      // Predicated region
      $region37: #{tpu_custom_call.1} parent=11 // pred_check
        %p270 = pneg %p190
      $region38: #{tpu_custom_call.1} parent=11 // pred_check_branch
        %272 = sbr.rel (%p270) target = $region40
      $region39: #{tpu_custom_call.1} parent=11 // pred_region
        _
      $region40: #{tpu_custom_call.1} parent=11 // pred_fallthru
        _
      // Predicated region
      $region41: #{tpu_custom_call.1} parent=11 // pred_check
        %p273 = pneg %p211
      $region42: #{tpu_custom_call.1} parent=11 // pred_check_branch
        %275 = sbr.rel (%p273) target = $region44
      $region43: #{tpu_custom_call.1} parent=11 // pred_region
        _
      $region44: #{tpu_custom_call.1} parent=11 // pred_fallthru
        _
    $region12: #{tpu_custom_call.1} parent=5 // pred_fallthru
      _
    %p276 = scmp.lt.s32.totalorder %s17, 2
    // Predicated region
    $region45: #{tpu_custom_call.1} parent=5 // pred_check
      %p277 = pneg %p276
    $region46: #{tpu_custom_call.1} parent=5 // pred_check_branch
      %279 = sbr.rel (%p277) target = $region48
    $region47: #{tpu_custom_call.1} parent=5 // pred_region
      // Predicated region
      $region49: #{tpu_custom_call.1} parent=47 // pred_check
        %p280 = pneg %p37
      $region50: #{tpu_custom_call.1} parent=47 // pred_check_branch
        %282 = sbr.rel (%p280) target = $region52
      $region51: #{tpu_custom_call.1} parent=47 // pred_region
        %s283 = smul.u32 8, %s17
        %p284 = scmp.lt.s32.totalorder %s283, 15
        %s285 = scalar_select %p284, %s283, 15
        %s286 = smul.addr %s285, 2
        %s287 = smul.addr %s286, 8
        %s288 = scalar_lea.vmem %s1, %s287
        %s289 = smul.u32 8, %s17
      $region52: #{tpu_custom_call.1} parent=47 // pred_fallthru
        _
    $region48: #{tpu_custom_call.1} parent=5 // pred_fallthru
      _
    %p290 = scmp.le.s32.totalorder 1, %s17
    %p291 = scmp.lt.s32.totalorder %s17, 3
    %p292 = pnand %p290, %p291
    %p293 = pneg %p292
    // Predicated region
    $region53: #{tpu_custom_call.1} parent=5 // pred_check
      _
    $region54: #{tpu_custom_call.1} parent=5 // pred_check_branch
      %295 = sbr.rel (%p292) target = $region56
    $region55: #{tpu_custom_call.1} parent=5 // pred_region
      %s296 = ssub.s32 %s17, 1
      %s297 = smul.u32 8, %s22
      %p298 = scmp.lt.s32.totalorder %s297, 15
      %s299 = scalar_select %p298, %s297, 15
      %s300 = smul.addr %s299, 2
      %s301 = smul.addr %s300, 8
      %s302 = scalar_lea.vmem %s1, %s301
      %p303 = pneg %p43
      %p304 = pneg %p40
      %p305 = pneg %p64
      %p306 = pneg %p61
      %p307 = pneg %p85
      %p308 = pneg %p82
      %p309 = pneg %p106
      %p310 = pneg %p103
      %p311 = pneg %p127
      %p312 = pneg %p124
      %p313 = pneg %p148
      %p314 = pneg %p145
      %p315 = pneg %p169
      %p316 = pneg %p166
      %p317 = pneg %p190
      %p318 = pneg %p187
      %p319 = pneg %p211
      %p320 = pneg %p208
      %p321 = pneg %p237
      %p322 = pneg %p234
      %p323 = scmp.lt.s32.totalorder %s22, 1
      %s324 = scalar_select %p323, %s22, 1
      %s325 = smul.addr %s324, 8
      %s326 = scalar_lea.vmem %s10, %s325
      %s327 = smul.u32 8, %s22
      %p328 = scmp.lt.s32.totalorder %s327, 15
      %s329 = scalar_select %p328, %s327, 15
      %s330 = smul.addr %s329, 2
      %s331 = smul.addr %s330, 8
      %s332 = scalar_lea.vmem %s1, %s331
      %s333 = smul.u32 8, %s22
      %p334 = scmp.lt.s32.totalorder %s22, 1
      %s335 = scalar_select %p334, %s22, 1
      %s336 = smul.addr %s335, 8
      %s337 = scalar_lea.vmem %s10, %s336
      %v338 = vld [vmem:[%s332] sm:$0xff]
      %v339 = vld [vmem:[%s332 + $0x8] sm:$0xff]
      %v340 = vld [vmem:[%s332 + $0x10] sm:$0xff]
      %v341 = vld [vmem:[%s332 + $0x18] sm:$0xff]
      %v342 = vld [vmem:[%s332 + $0x20] sm:$0xff]
      %v343 = vld [vmem:[%s332 + $0x28] sm:$0xff]
      %v344 = vld [vmem:[%s332 + $0x30] sm:$0xff]
      %v345 = vld [vmem:[%s332 + $0x38] sm:$0xff]
      %v346 = vld [vmem:[%s332 + $0x40] sm:$0xff]
      %v347 = vld [vmem:[%s332 + $0x48] sm:$0xff]
      %v348 = vld [vmem:[%s332 + $0x50] sm:$0xff]
      %v349 = vld [vmem:[%s332 + $0x58] sm:$0xff]
      %v350 = vld [vmem:[%s332 + $0x60] sm:$0xff]
      %v351 = vld [vmem:[%s332 + $0x68] sm:$0xff]
      %v352 = vld [vmem:[%s332 + $0x70] sm:$0xff]
      %v353 = vld [vmem:[%s332 + $0x78] sm:$0xff]
      %v354 = vlaneseq
      %v355 = vshrl.u32 %v354, 7
      %v356 = vadd.s32 %v355, 8
      %s357 = sld [smem:[#allocation3]]
      %v358 = vstv %s357
      %vm359 = vcmp.eq.s32.totalorder %v355, %v358
      %vm360 = vcmp.eq.s32.totalorder %v356, %v358
      %v361 = vsel %vm359, 1, 0
      %v362 = vsel %vm360, 1, 0
      %v363 = vcvt.s32.f32 %v361
      %v364 = vcvt.s32.f32 %v362
      %v365 = vmul.f32 %v338, %v363
      %v366 = vmul.f32 %v339, %v364
      %v367 = vmul.f32 %v340, %v363
      %v368 = vmul.f32 %v341, %v364
      %v369 = vmul.f32 %v342, %v363
      %v370 = vmul.f32 %v343, %v364
      %v371 = vmul.f32 %v344, %v363
      %v372 = vmul.f32 %v345, %v364
      %v373 = vmul.f32 %v346, %v363
      %v374 = vmul.f32 %v347, %v364
      %v375 = vmul.f32 %v348, %v363
      %v376 = vmul.f32 %v349, %v364
      %v377 = vmul.f32 %v350, %v363
      %v378 = vmul.f32 %v351, %v364
      %v379 = vmul.f32 %v352, %v363
      %v380 = vmul.f32 %v353, %v364
      %vm381 = vcmask 31744
      %v382 = vsel %vm381, %v365, 0.0
      %v383 = vsel %vm381, %v366, 0.0
      %v384 = vadd.f32 %v382, %v383
      %v385 = vrot.slane %v384, 4
      %v386 = vadd.f32 %v384, %v385
      %v387 = vrot.slane %v386, 2
      %v388 = vadd.f32 %v386, %v387
      %v389 = vrot.slane %v388, 1
      %v390 = vadd.f32 %v388, %v389
      %v391 = vsel %vm381, %v367, 0.0
      %v392 = vsel %vm381, %v368, 0.0
      %v393 = vadd.f32 %v391, %v392
      %v394 = vrot.slane %v393, 4
      %v395 = vadd.f32 %v393, %v394
      %v396 = vrot.slane %v395, 2
      %v397 = vadd.f32 %v395, %v396
      %v398 = vrot.slane %v397, 1
      %v399 = vadd.f32 %v397, %v398
      %v400 = vsel %vm381, %v369, 0.0
      %v401 = vsel %vm381, %v370, 0.0
      %v402 = vadd.f32 %v400, %v401
      %v403 = vrot.slane %v402, 4
      %v404 = vadd.f32 %v402, %v403
      %v405 = vrot.slane %v404, 2
      %v406 = vadd.f32 %v404, %v405
      %v407 = vrot.slane %v406, 1
      %v408 = vadd.f32 %v406, %v407
      %v409 = vsel %vm381, %v371, 0.0
      %v410 = vsel %vm381, %v372, 0.0
      %v411 = vadd.f32 %v409, %v410
      %v412 = vrot.slane %v411, 4
      %v413 = vadd.f32 %v411, %v412
      %v414 = vrot.slane %v413, 2
      %v415 = vadd.f32 %v413, %v414
      %v416 = vrot.slane %v415, 1
      %v417 = vadd.f32 %v415, %v416
      %v418 = vsel %vm381, %v373, 0.0
      %v419 = vsel %vm381, %v374, 0.0
      %v420 = vadd.f32 %v418, %v419
      %v421 = vrot.slane %v420, 4
      %v422 = vadd.f32 %v420, %v421
      %v423 = vrot.slane %v422, 2
      %v424 = vadd.f32 %v422, %v423
      %v425 = vrot.slane %v424, 1
      %v426 = vadd.f32 %v424, %v425
      %v427 = vsel %vm381, %v375, 0.0
      %v428 = vsel %vm381, %v376, 0.0
      %v429 = vadd.f32 %v427, %v428
      %v430 = vrot.slane %v429, 4
      %v431 = vadd.f32 %v429, %v430
      %v432 = vrot.slane %v431, 2
      %v433 = vadd.f32 %v431, %v432
      %v434 = vrot.slane %v433, 1
      %v435 = vadd.f32 %v433, %v434
      %v436 = vsel %vm381, %v377, 0.0
      %v437 = vsel %vm381, %v378, 0.0
      %v438 = vadd.f32 %v436, %v437
      %v439 = vrot.slane %v438, 4
      %v440 = vadd.f32 %v438, %v439
      %v441 = vrot.slane %v440, 2
      %v442 = vadd.f32 %v440, %v441
      %v443 = vrot.slane %v442, 1
      %v444 = vadd.f32 %v442, %v443
      %v445 = vsel %vm381, %v379, 0.0
      %v446 = vsel %vm381, %v380, 0.0
      %v447 = vadd.f32 %v445, %v446
      %v448 = vrot.slane %v447, 4
      %v449 = vadd.f32 %v447, %v448
      %v450 = vrot.slane %v449, 2
      %v451 = vadd.f32 %v449, %v450
      %v452 = vrot.slane %v451, 1
      %v453 = vadd.f32 %v451, %v452
      %v454 = vld [vmem:[%s3] sm:$0xf]
      %v456 = vsel %vm381, %v338, 0
      %v459 = vsel %vm381, %v339, 0
      %v462 = vsel %vm381, %v340, 0
      %v465 = vsel %vm381, %v341, 0
      %v468 = vsel %vm381, %v342, 0
      %v471 = vsel %vm381, %v343, 0
      %v474 = vsel %vm381, %v344, 0
      %v477 = vsel %vm381, %v345, 0
      %v480 = vsel %vm381, %v346, 0
      %v483 = vsel %vm381, %v347, 0
      %v486 = vsel %vm381, %v348, 0
      %v489 = vsel %vm381, %v349, 0
      %v492 = vsel %vm381, %v350, 0
      %v495 = vsel %vm381, %v351, 0
      %v498 = vsel %vm381, %v352, 0
      %v501 = vsel %vm381, %v353, 0
      %vm503 = vcmask 1043456
      %v505 = vsel %vm503, %v454, 0
      %507 = vmatprep.subr.mxu0 0.0
      %508 = vmatpush1.msra.mxu0 %v505
      %509 = vmatprep.subr.mxu0 0.0
      %510 = vmatpush1.msra.mxu0 0.0
      %511 = vmatprep.subr.mxu0 0.0
      %512 = vmatpush1.msra.mxu0 0.0
      %513 = vmatprep.subr.mxu0 0.0
      %514 = vmatpush1.msra.mxu0 0.0
      %515 = vmatprep.subr.mxu0 0.0
      %516 = vmatpush1.msra.mxu0 0.0
      %517 = vmatprep.subr.mxu0 0.0
      %518 = vmatpush1.msra.mxu0 0.0
      %519 = vmatprep.subr.mxu0 0.0
      %520 = vmatpush1.msra.mxu0 0.0
      %521 = vmatprep.subr.mxu0 0.0
      %522 = vmatpush1.msra.mxu0 0.0
      %523 = vmatprep.subr.mxu0 0.0
      %524 = vmatpush1.msra.mxu0 0.0
      %525 = vmatprep.subr.mxu0 0.0
      %526 = vmatpush1.msra.mxu0 0.0
      %527 = vmatprep.subr.mxu0 0.0
      %528 = vmatpush1.msra.mxu0 0.0
      %529 = vmatprep.subr.mxu0 0.0
      %530 = vmatpush1.msra.mxu0 0.0
      %531 = vmatprep.subr.mxu0 0.0
      %532 = vmatpush1.msra.mxu0 0.0
      %533 = vmatprep.subr.mxu0 0.0
      %534 = vmatpush1.msra.mxu0 0.0
      %535 = vmatprep.subr.mxu0 0.0
      %536 = vmatpush1.msra.mxu0 0.0
      %537 = vmatprep.subr.mxu0 0.0
      %538 = vmatpush1.msra.mxu0 0.0
      %539 = vmatprep.subr.mxu0 0.0
      %540 = vmatpush1.msra.mxu0 0.0
      %541 = vmatprep.subr.mxu0 0.0
      %542 = vmatpush1.msra.mxu0 0.0
      %543 = vmatprep.subr.mxu0 0.0
      %544 = vmatpush1.msra.mxu0 0.0
      %545 = vmatprep.subr.mxu0 0.0
      %546 = vmatpush1.msra.mxu0 0.0
      %547 = vmatprep.subr.mxu0 0.0
      %548 = vmatpush1.msra.mxu0 0.0
      %549 = vmatprep.subr.mxu0 0.0
      %550 = vmatpush1.msra.mxu0 0.0
      %551 = vmatprep.subr.mxu0 0.0
      %552 = vmatpush1.msra.mxu0 0.0
      %553 = vmatprep.subr.mxu0 0.0
      %554 = vmatpush1.msra.mxu0 0.0
      %555 = vmatprep.subr.mxu0 0.0
      %556 = vmatpush1.msra.mxu0 0.0
      %557 = vmatprep.subr.mxu0 0.0
      %558 = vmatpush1.msra.mxu0 0.0
      %559 = vmatprep.subr.mxu0 0.0
      %560 = vmatpush1.msra.mxu0 0.0
      %561 = vmatprep.subr.mxu0 0.0
      %562 = vmatpush1.msra.mxu0 0.0
      %563 = vmatprep.subr.mxu0 0.0
      %564 = vmatpush1.msra.mxu0 0.0
      %565 = vmatprep.subr.mxu0 0.0
      %566 = vmatpush1.msra.mxu0 0.0
      %567 = vmatprep.subr.mxu0 0.0
      %568 = vmatpush1.msra.mxu0 0.0
      %569 = vmatprep.subr.mxu0 0.0
      %570 = vmatpush1.msra.mxu0 0.0
      %571 = vmatprep.mubr.f32.mxu0 0.0
      %572 = vmatmul.mubr.f32.gmra.mrb[0].mxu0 %v456
      %v573 = vpop.f32.mrb[0].mxu0
      %v574 = vadd.f32 0.0, %v573
      %v575 = vpop.f32.mrb[0].mxu0
      %576 = vmatprep.mubr.f32.mxu0 0.0
      %577 = vmatmul.mubr.f32.gmra.mrb[0].mxu0 %v459
      %v578 = vpop.f32.mrb[0].mxu0
      %v579 = vadd.f32 0.0, %v578
      %v580 = vpop.f32.mrb[0].mxu0
      %581 = vmatprep.mubr.f32.mxu0 0.0
      %582 = vmatmul.mubr.f32.gmra.mrb[0].mxu0 %v462
      %v583 = vpop.f32.mrb[0].mxu0
      %v584 = vadd.f32 0.0, %v583
      %v585 = vpop.f32.mrb[0].mxu0
      %586 = vmatprep.mubr.f32.mxu0 0.0
      %587 = vmatmul.mubr.f32.gmra.mrb[0].mxu0 %v465
      %v588 = vpop.f32.mrb[0].mxu0
      %v589 = vadd.f32 0.0, %v588
      %v590 = vpop.f32.mrb[0].mxu0
      %591 = vmatprep.mubr.f32.mxu0 0.0
      %592 = vmatmul.mubr.f32.gmra.mrb[0].mxu0 %v468
      %v593 = vpop.f32.mrb[0].mxu0
      %v594 = vadd.f32 0.0, %v593
      %v595 = vpop.f32.mrb[0].mxu0
      %596 = vmatprep.mubr.f32.mxu0 0.0
      %597 = vmatmul.mubr.f32.gmra.mrb[0].mxu0 %v471
      %v598 = vpop.f32.mrb[0].mxu0
      %v599 = vadd.f32 0.0, %v598
      %v600 = vpop.f32.mrb[0].mxu0
      %601 = vmatprep.mubr.f32.mxu0 0.0
      %602 = vmatmul.mubr.f32.gmra.mrb[0].mxu0 %v474
      %v603 = vpop.f32.mrb[0].mxu0
      %v604 = vadd.f32 0.0, %v603
      %v605 = vpop.f32.mrb[0].mxu0
      %606 = vmatprep.mubr.f32.mxu0 0.0
      %607 = vmatmul.mubr.f32.gmra.mrb[0].mxu0 %v477
      %v608 = vpop.f32.mrb[0].mxu0
      %v609 = vadd.f32 0.0, %v608
      %v610 = vpop.f32.mrb[0].mxu0
      %611 = vmatprep.mubr.f32.mxu0 0.0
      %612 = vmatmul.mubr.f32.gmra.mrb[0].mxu0 %v480
      %v613 = vpop.f32.mrb[0].mxu0
      %v614 = vadd.f32 0.0, %v613
      %v615 = vpop.f32.mrb[0].mxu0
      %616 = vmatprep.mubr.f32.mxu0 0.0
      %617 = vmatmul.mubr.f32.gmra.mrb[0].mxu0 %v483
      %v618 = vpop.f32.mrb[0].mxu0
      %v619 = vadd.f32 0.0, %v618
      %v620 = vpop.f32.mrb[0].mxu0
      %621 = vmatprep.mubr.f32.mxu0 0.0
      %622 = vmatmul.mubr.f32.gmra.mrb[0].mxu0 %v486
      %v623 = vpop.f32.mrb[0].mxu0
      %v624 = vadd.f32 0.0, %v623
      %v625 = vpop.f32.mrb[0].mxu0
      %626 = vmatprep.mubr.f32.mxu0 0.0
      %627 = vmatmul.mubr.f32.gmra.mrb[0].mxu0 %v489
      %v628 = vpop.f32.mrb[0].mxu0
      %v629 = vadd.f32 0.0, %v628
      %v630 = vpop.f32.mrb[0].mxu0
      %631 = vmatprep.mubr.f32.mxu0 0.0
      %632 = vmatmul.mubr.f32.gmra.mrb[0].mxu0 %v492
      %v633 = vpop.f32.mrb[0].mxu0
      %v634 = vadd.f32 0.0, %v633
      %v635 = vpop.f32.mrb[0].mxu0
      %636 = vmatprep.mubr.f32.mxu0 0.0
      %637 = vmatmul.mubr.f32.gmra.mrb[0].mxu0 %v495
      %v638 = vpop.f32.mrb[0].mxu0
      %v639 = vadd.f32 0.0, %v638
      %v640 = vpop.f32.mrb[0].mxu0
      %641 = vmatprep.mubr.f32.mxu0 0.0
      %642 = vmatmul.mubr.f32.gmra.mrb[0].mxu0 %v498
      %v643 = vpop.f32.mrb[0].mxu0
      %v644 = vadd.f32 0.0, %v643
      %v645 = vpop.f32.mrb[0].mxu0
      %646 = vmatprep.mubr.f32.mxu0 0.0
      %647 = vmatmul.mubr.f32.gmra.mrb[0].mxu0 %v501
      %v648 = vpop.f32.mrb[0].mxu0
      %v649 = vadd.f32 0.0, %v648
      %v650 = vpop.f32.mrb[0].mxu0
      %651 = vdwg.mxu0
      %v652 = vld [vmem:[%s4] sm:$0xf]
      %vm661 = vcmask 1041409
      %v662 = vsel %vm661, %v399, %v390
      %vm663 = vcmask 1042434
      %v664 = vsel %vm663, %v408, %v662
      %vm665 = vcmask 1043459
      %v666 = vsel %vm665, %v417, %v664
      %vm667 = vcmask 1044484
      %v668 = vsel %vm667, %v426, %v666
      %vm669 = vcmask 1045509
      %v670 = vsel %vm669, %v435, %v668
      %vm671 = vcmask 1046534
      %v672 = vsel %vm671, %v444, %v670
      %vm673 = vcmask 1047559
      %v674 = vsel %vm673, %v453, %v672
      %v675 = vsel %vm381, %v674, 0
      %v678 = vsel %vm503, %v652, 0
      %680 = vmatprep.subr.mxu0 0.0
      %681 = vmatpush1.msra.mxu0 %v678
      %682 = vmatprep.subr.mxu0 0.0
      %683 = vmatpush1.msra.mxu0 0.0
      %684 = vmatprep.subr.mxu0 0.0
      %685 = vmatpush1.msra.mxu0 0.0
      %686 = vmatprep.subr.mxu0 0.0
      %687 = vmatpush1.msra.mxu0 0.0
      %688 = vmatprep.subr.mxu0 0.0
      %689 = vmatpush1.msra.mxu0 0.0
      %690 = vmatprep.subr.mxu0 0.0
      %691 = vmatpush1.msra.mxu0 0.0
      %692 = vmatprep.subr.mxu0 0.0
      %693 = vmatpush1.msra.mxu0 0.0
      %694 = vmatprep.subr.mxu0 0.0
      %695 = vmatpush1.msra.mxu0 0.0
      %696 = vmatprep.subr.mxu0 0.0
      %697 = vmatpush1.msra.mxu0 0.0
      %698 = vmatprep.subr.mxu0 0.0
      %699 = vmatpush1.msra.mxu0 0.0
      %700 = vmatprep.subr.mxu0 0.0
      %701 = vmatpush1.msra.mxu0 0.0
      %702 = vmatprep.subr.mxu0 0.0
      %703 = vmatpush1.msra.mxu0 0.0
      %704 = vmatprep.subr.mxu0 0.0
      %705 = vmatpush1.msra.mxu0 0.0
      %706 = vmatprep.subr.mxu0 0.0
      %707 = vmatpush1.msra.mxu0 0.0
      %708 = vmatprep.subr.mxu0 0.0
      %709 = vmatpush1.msra.mxu0 0.0
      %710 = vmatprep.subr.mxu0 0.0
      %711 = vmatpush1.msra.mxu0 0.0
      %712 = vmatprep.subr.mxu0 0.0
      %713 = vmatpush1.msra.mxu0 0.0
      %714 = vmatprep.subr.mxu0 0.0
      %715 = vmatpush1.msra.mxu0 0.0
      %716 = vmatprep.subr.mxu0 0.0
      %717 = vmatpush1.msra.mxu0 0.0
      %718 = vmatprep.subr.mxu0 0.0
      %719 = vmatpush1.msra.mxu0 0.0
      %720 = vmatprep.subr.mxu0 0.0
      %721 = vmatpush1.msra.mxu0 0.0
      %722 = vmatprep.subr.mxu0 0.0
      %723 = vmatpush1.msra.mxu0 0.0
      %724 = vmatprep.subr.mxu0 0.0
      %725 = vmatpush1.msra.mxu0 0.0
      %726 = vmatprep.subr.mxu0 0.0
      %727 = vmatpush1.msra.mxu0 0.0
      %728 = vmatprep.subr.mxu0 0.0
      %729 = vmatpush1.msra.mxu0 0.0
      %730 = vmatprep.subr.mxu0 0.0
      %731 = vmatpush1.msra.mxu0 0.0
      %732 = vmatprep.subr.mxu0 0.0
      %733 = vmatpush1.msra.mxu0 0.0
      %734 = vmatprep.subr.mxu0 0.0
      %735 = vmatpush1.msra.mxu0 0.0
      %736 = vmatprep.subr.mxu0 0.0
      %737 = vmatpush1.msra.mxu0 0.0
      %738 = vmatprep.subr.mxu0 0.0
      %739 = vmatpush1.msra.mxu0 0.0
      %740 = vmatprep.subr.mxu0 0.0
      %741 = vmatpush1.msra.mxu0 0.0
      %742 = vmatprep.subr.mxu0 0.0
      %743 = vmatpush1.msra.mxu0 0.0
      %744 = vmatprep.mubr.f32.mxu0 0.0
      %745 = vmatmul.mubr.f32.gmra.mrb[0].mxu0 %v675
      %v746 = vpop.f32.mrb[0].mxu0
      %v747 = vadd.f32 0.0, %v746
      %v748 = vpop.f32.mrb[0].mxu0
      %749 = vdwg.mxu0
      %v751 = vcombine.high %v747, %v747
      %v753 = vunpack.c.l.s4 1966171168
      %v754 = vunpack.c.0.s8 %v753
      %v755 = vlaneseq
      %v756 = vshrl.u32 %v755, 7
      %v757 = vsub.s32 %v754, %v756
      %v758 = vrot.slane %v747, %v757
      %v760 = vunpack.c.l.s4 1966171168
      %v761 = vunpack.c.0.s8 %v760
      %v762 = vlaneseq
      %v763 = vshrl.u32 %v762, 7
      %v764 = vsub.s32 %v761, %v763
      %v765 = vrot.slane %v751, %v764
      %v766 = vcombine.high %v758, %v758
      %v767 = vcombine.high %v765, %v765
      %v769 = vunpack.c.l.s4 1966171168
      %v770 = vunpack.c.0.s8 %v769
      %v771 = vlaneseq
      %v772 = vshrl.u32 %v771, 7
      %v773 = vsub.s32 %v770, %v772
      %v774 = vrot.slane %v758, %v773
      %v776 = vunpack.c.l.s4 1966171168
      %v777 = vunpack.c.0.s8 %v776
      %v778 = vlaneseq
      %v779 = vshrl.u32 %v778, 7
      %v780 = vsub.s32 %v777, %v779
      %v781 = vrot.slane %v765, %v780
      %v783 = vunpack.c.l.s4 1966171168
      %v784 = vunpack.c.0.s8 %v783
      %v785 = vlaneseq
      %v786 = vshrl.u32 %v785, 7
      %v787 = vsub.s32 %v784, %v786
      %v788 = vrot.slane %v766, %v787
      %v790 = vunpack.c.l.s4 1966171168
      %v791 = vunpack.c.0.s8 %v790
      %v792 = vlaneseq
      %v793 = vshrl.u32 %v792, 7
      %v794 = vsub.s32 %v791, %v793
      %v795 = vrot.slane %v767, %v794
      %v796 = vcombine.high %v774, %v774
      %v797 = vcombine.high %v781, %v781
      %v798 = vcombine.high %v788, %v788
      %v799 = vcombine.high %v795, %v795
      %v800 = vlaneseq
      %v801 = vshrl.u32 %v800, 7
      %v802 = vsub.s32 0, %v801
      %v803 = vrot.slane %v774, %v802
      %v804 = vlaneseq
      %v805 = vshrl.u32 %v804, 7
      %v806 = vsub.s32 0, %v805
      %v807 = vrot.slane %v788, %v806
      %v808 = vlaneseq
      %v809 = vshrl.u32 %v808, 7
      %v810 = vsub.s32 0, %v809
      %v811 = vrot.slane %v796, %v810
      %v812 = vlaneseq
      %v813 = vshrl.u32 %v812, 7
      %v814 = vsub.s32 0, %v813
      %v815 = vrot.slane %v798, %v814
      %v816 = vlaneseq
      %v817 = vshrl.u32 %v816, 7
      %v818 = vsub.s32 0, %v817
      %v819 = vrot.slane %v781, %v818
      %v820 = vlaneseq
      %v821 = vshrl.u32 %v820, 7
      %v822 = vsub.s32 0, %v821
      %v823 = vrot.slane %v795, %v822
      %v824 = vlaneseq
      %v825 = vshrl.u32 %v824, 7
      %v826 = vsub.s32 0, %v825
      %v827 = vrot.slane %v797, %v826
      %v828 = vlaneseq
      %v829 = vshrl.u32 %v828, 7
      %v830 = vsub.s32 0, %v829
      %v831 = vrot.slane %v799, %v830
      %v840 = vadd.f32 %v574, %v803
      %v841 = vadd.f32 %v579, %v803
      %v842 = vadd.f32 %v584, %v807
      %v843 = vadd.f32 %v589, %v807
      %v844 = vadd.f32 %v594, %v811
      %v845 = vadd.f32 %v599, %v811
      %v846 = vadd.f32 %v604, %v815
      %v847 = vadd.f32 %v609, %v815
      %v848 = vadd.f32 %v614, %v819
      %v849 = vadd.f32 %v619, %v819
      %v850 = vadd.f32 %v624, %v823
      %v851 = vadd.f32 %v629, %v823
      %v852 = vadd.f32 %v634, %v827
      %v853 = vadd.f32 %v639, %v827
      %v854 = vadd.f32 %v644, %v831
      %v855 = vadd.f32 %v649, %v831
      %v856 = vld [vmem:[%s6] sm:$0x1]
      %v857 = vlaneseq
      %v858 = vshrl.u32 %v857, 7
      %v859 = vsub.s32 0, %v858
      %v860 = vrot.slane %v856, %v859
      %v861 = vadd.f32 %v840, %v860
      %v862 = vadd.f32 %v841, %v860
      %v863 = vadd.f32 %v842, %v860
      %v864 = vadd.f32 %v843, %v860
      %v865 = vadd.f32 %v844, %v860
      %v866 = vadd.f32 %v845, %v860
      %v867 = vadd.f32 %v846, %v860
      %v868 = vadd.f32 %v847, %v860
      %v869 = vadd.f32 %v848, %v860
      %v870 = vadd.f32 %v849, %v860
      %v871 = vadd.f32 %v850, %v860
      %v872 = vadd.f32 %v851, %v860
      %v873 = vadd.f32 %v852, %v860
      %v874 = vadd.f32 %v853, %v860
      %v875 = vadd.f32 %v854, %v860
      %v876 = vadd.f32 %v855, %v860
      %v877 = vmax.f32 %v861, 0.0
      %v878 = vmax.f32 %v862, 0.0
      %v879 = vmax.f32 %v863, 0.0
      %v880 = vmax.f32 %v864, 0.0
      %v881 = vmax.f32 %v865, 0.0
      %v882 = vmax.f32 %v866, 0.0
      %v883 = vmax.f32 %v867, 0.0
      %v884 = vmax.f32 %v868, 0.0
      %v885 = vmax.f32 %v869, 0.0
      %v886 = vmax.f32 %v870, 0.0
      %v887 = vmax.f32 %v871, 0.0
      %v888 = vmax.f32 %v872, 0.0
      %v889 = vmax.f32 %v873, 0.0
      %v890 = vmax.f32 %v874, 0.0
      %v891 = vmax.f32 %v875, 0.0
      %v892 = vmax.f32 %v876, 0.0
      %v893 = vld [vmem:[%s5] sm:$0xff]
      %v894 = vld [vmem:[%s5 + $0x8] sm:$0xff]
      %v895 = vld [vmem:[%s5 + $0x10] sm:$0xff]
      %v896 = vld [vmem:[%s5 + $0x18] sm:$0xff]
      %v897 = vld [vmem:[%s6 + $0x1] sm:$0x1]
      %v898 = vlaneseq
      %v899 = vshrl.u32 %v898, 7
      %v900 = vsub.s32 0, %v899
      %v901 = vrot.slane %v897, %v900
      %vm902 = vcmask 261120
      %v904 = vsel %vm902, %v877, 0
      %v907 = vsel %vm902, %v878, 0
      %v910 = vsel %vm902, %v879, 0
      %v913 = vsel %vm902, %v880, 0
      %v916 = vsel %vm902, %v881, 0
      %v919 = vsel %vm902, %v882, 0
      %v922 = vsel %vm902, %v883, 0
      %v925 = vsel %vm902, %v884, 0
      %v928 = vsel %vm902, %v885, 0
      %v931 = vsel %vm902, %v886, 0
      %v934 = vsel %vm902, %v887, 0
      %v937 = vsel %vm902, %v888, 0
      %v940 = vsel %vm902, %v889, 0
      %v943 = vsel %vm902, %v890, 0
      %v946 = vsel %vm902, %v891, 0
      %v949 = vsel %vm902, %v892, 0
      %951 = vmatprep.subr.mxu0 0.0
      %952 = vmatpush1.msra.mxu0 %v893
      %953 = vmatprep.subr.mxu0 0.0
      %954 = vmatpush1.msra.mxu0 %v894
      %955 = vmatprep.subr.mxu0 0.0
      %956 = vmatpush1.msra.mxu0 %v895
      %957 = vmatprep.subr.mxu0 0.0
      %958 = vmatpush1.msra.mxu0 %v896
      %959 = vmatprep.subr.mxu0 0.0
      %960 = vmatpush1.msra.mxu0 0.0
      %961 = vmatprep.subr.mxu0 0.0
      %962 = vmatpush1.msra.mxu0 0.0
      %963 = vmatprep.subr.mxu0 0.0
      %964 = vmatpush1.msra.mxu0 0.0
      %965 = vmatprep.subr.mxu0 0.0
      %966 = vmatpush1.msra.mxu0 0.0
      %967 = vmatprep.subr.mxu0 0.0
      %968 = vmatpush1.msra.mxu0 0.0
      %969 = vmatprep.subr.mxu0 0.0
      %970 = vmatpush1.msra.mxu0 0.0
      %971 = vmatprep.subr.mxu0 0.0
      %972 = vmatpush1.msra.mxu0 0.0
      %973 = vmatprep.subr.mxu0 0.0
      %974 = vmatpush1.msra.mxu0 0.0
      %975 = vmatprep.subr.mxu0 0.0
      %976 = vmatpush1.msra.mxu0 0.0
      %977 = vmatprep.subr.mxu0 0.0
      %978 = vmatpush1.msra.mxu0 0.0
      %979 = vmatprep.subr.mxu0 0.0
      %980 = vmatpush1.msra.mxu0 0.0
      %981 = vmatprep.subr.mxu0 0.0
      %982 = vmatpush1.msra.mxu0 0.0
      %983 = vmatprep.subr.mxu0 0.0
      %984 = vmatpush1.msra.mxu0 0.0
      %985 = vmatprep.subr.mxu0 0.0
      %986 = vmatpush1.msra.mxu0 0.0
      %987 = vmatprep.subr.mxu0 0.0
      %988 = vmatpush1.msra.mxu0 0.0
      %989 = vmatprep.subr.mxu0 0.0
      %990 = vmatpush1.msra.mxu0 0.0
      %991 = vmatprep.subr.mxu0 0.0
      %992 = vmatpush1.msra.mxu0 0.0
      %993 = vmatprep.subr.mxu0 0.0
      %994 = vmatpush1.msra.mxu0 0.0
      %995 = vmatprep.subr.mxu0 0.0
      %996 = vmatpush1.msra.mxu0 0.0
      %997 = vmatprep.subr.mxu0 0.0
      %998 = vmatpush1.msra.mxu0 0.0
      %999 = vmatprep.subr.mxu0 0.0
      %1000 = vmatpush1.msra.mxu0 0.0
      %1001 = vmatprep.subr.mxu0 0.0
      %1002 = vmatpush1.msra.mxu0 0.0
      %1003 = vmatprep.subr.mxu0 0.0
      %1004 = vmatpush1.msra.mxu0 0.0
      %1005 = vmatprep.subr.mxu0 0.0
      %1006 = vmatpush1.msra.mxu0 0.0
      %1007 = vmatprep.subr.mxu0 0.0
      %1008 = vmatpush1.msra.mxu0 0.0
      %1009 = vmatprep.subr.mxu0 0.0
      %1010 = vmatpush1.msra.mxu0 0.0
      %1011 = vmatprep.subr.mxu0 0.0
      %1012 = vmatpush1.msra.mxu0 0.0
      %1013 = vmatprep.subr.mxu0 0.0
      %1014 = vmatpush1.msra.mxu0 0.0
      %1015 = vmatprep.mubr.f32.mxu0 0.0
      %1016 = vmatmul.mubr.f32.gmra.mrb[0].mxu0 %v904
      %v1017 = vpop.f32.mrb[0].mxu0
      %v1018 = vadd.f32 %v901, %v1017
      %v1019 = vpop.f32.mrb[0].mxu0
      %1020 = vmatprep.mubr.f32.mxu0 0.0
      %1021 = vmatmul.mubr.f32.gmra.mrb[0].mxu0 %v907
      %v1022 = vpop.f32.mrb[0].mxu0
      %v1023 = vadd.f32 %v901, %v1022
      %v1024 = vpop.f32.mrb[0].mxu0
      %1025 = vmatprep.mubr.f32.mxu0 0.0
      %1026 = vmatmul.mubr.f32.gmra.mrb[0].mxu0 %v910
      %v1027 = vpop.f32.mrb[0].mxu0
      %v1028 = vadd.f32 %v901, %v1027
      %v1029 = vpop.f32.mrb[0].mxu0
      %1030 = vmatprep.mubr.f32.mxu0 0.0
      %1031 = vmatmul.mubr.f32.gmra.mrb[0].mxu0 %v913
      %v1032 = vpop.f32.mrb[0].mxu0
      %v1033 = vadd.f32 %v901, %v1032
      %v1034 = vpop.f32.mrb[0].mxu0
      %1035 = vmatprep.mubr.f32.mxu0 0.0
      %1036 = vmatmul.mubr.f32.gmra.mrb[0].mxu0 %v916
      %v1037 = vpop.f32.mrb[0].mxu0
      %v1038 = vadd.f32 %v901, %v1037
      %v1039 = vpop.f32.mrb[0].mxu0
      %1040 = vmatprep.mubr.f32.mxu0 0.0
      %1041 = vmatmul.mubr.f32.gmra.mrb[0].mxu0 %v919
      %v1042 = vpop.f32.mrb[0].mxu0
      %v1043 = vadd.f32 %v901, %v1042
      %v1044 = vpop.f32.mrb[0].mxu0
      %1045 = vmatprep.mubr.f32.mxu0 0.0
      %1046 = vmatmul.mubr.f32.gmra.mrb[0].mxu0 %v922
      %v1047 = vpop.f32.mrb[0].mxu0
      %v1048 = vadd.f32 %v901, %v1047
      %v1049 = vpop.f32.mrb[0].mxu0
      %1050 = vmatprep.mubr.f32.mxu0 0.0
      %1051 = vmatmul.mubr.f32.gmra.mrb[0].mxu0 %v925
      %v1052 = vpop.f32.mrb[0].mxu0
      %v1053 = vadd.f32 %v901, %v1052
      %v1054 = vpop.f32.mrb[0].mxu0
      %1055 = vmatprep.mubr.f32.mxu0 0.0
      %1056 = vmatmul.mubr.f32.gmra.mrb[0].mxu0 %v928
      %v1057 = vpop.f32.mrb[0].mxu0
      %v1058 = vadd.f32 %v901, %v1057
      %v1059 = vpop.f32.mrb[0].mxu0
      %1060 = vmatprep.mubr.f32.mxu0 0.0
      %1061 = vmatmul.mubr.f32.gmra.mrb[0].mxu0 %v931
      %v1062 = vpop.f32.mrb[0].mxu0
      %v1063 = vadd.f32 %v901, %v1062
      %v1064 = vpop.f32.mrb[0].mxu0
      %1065 = vmatprep.mubr.f32.mxu0 0.0
      %1066 = vmatmul.mubr.f32.gmra.mrb[0].mxu0 %v934
      %v1067 = vpop.f32.mrb[0].mxu0
      %v1068 = vadd.f32 %v901, %v1067
      %v1069 = vpop.f32.mrb[0].mxu0
      %1070 = vmatprep.mubr.f32.mxu0 0.0
      %1071 = vmatmul.mubr.f32.gmra.mrb[0].mxu0 %v937
      %v1072 = vpop.f32.mrb[0].mxu0
      %v1073 = vadd.f32 %v901, %v1072
      %v1074 = vpop.f32.mrb[0].mxu0
      %1075 = vmatprep.mubr.f32.mxu0 0.0
      %1076 = vmatmul.mubr.f32.gmra.mrb[0].mxu0 %v940
      %v1077 = vpop.f32.mrb[0].mxu0
      %v1078 = vadd.f32 %v901, %v1077
      %v1079 = vpop.f32.mrb[0].mxu0
      %1080 = vmatprep.mubr.f32.mxu0 0.0
      %1081 = vmatmul.mubr.f32.gmra.mrb[0].mxu0 %v943
      %v1082 = vpop.f32.mrb[0].mxu0
      %v1083 = vadd.f32 %v901, %v1082
      %v1084 = vpop.f32.mrb[0].mxu0
      %1085 = vmatprep.mubr.f32.mxu0 0.0
      %1086 = vmatmul.mubr.f32.gmra.mrb[0].mxu0 %v946
      %v1087 = vpop.f32.mrb[0].mxu0
      %v1088 = vadd.f32 %v901, %v1087
      %v1089 = vpop.f32.mrb[0].mxu0
      %1090 = vmatprep.mubr.f32.mxu0 0.0
      %1091 = vmatmul.mubr.f32.gmra.mrb[0].mxu0 %v949
      %v1092 = vpop.f32.mrb[0].mxu0
      %v1093 = vadd.f32 %v901, %v1092
      %v1094 = vpop.f32.mrb[0].mxu0
      %1095 = vdwg.mxu0
      %v1096 = vmax.f32 %v1018, 0.0
      %v1097 = vmax.f32 %v1023, 0.0
      %v1098 = vmax.f32 %v1028, 0.0
      %v1099 = vmax.f32 %v1033, 0.0
      %v1100 = vmax.f32 %v1038, 0.0
      %v1101 = vmax.f32 %v1043, 0.0
      %v1102 = vmax.f32 %v1048, 0.0
      %v1103 = vmax.f32 %v1053, 0.0
      %v1104 = vmax.f32 %v1058, 0.0
      %v1105 = vmax.f32 %v1063, 0.0
      %v1106 = vmax.f32 %v1068, 0.0
      %v1107 = vmax.f32 %v1073, 0.0
      %v1108 = vmax.f32 %v1078, 0.0
      %v1109 = vmax.f32 %v1083, 0.0
      %v1110 = vmax.f32 %v1088, 0.0
      %v1111 = vmax.f32 %v1093, 0.0
      %v1112 = vld [vmem:[%s2] sm:$0xff]
      %v1113 = vld [vmem:[%s2 + $0x8] sm:$0xff]
      %1115 = vset.pattern.permute.xlu0 0
      %1116 = vperm.xlu0 %1115, %v1112
      %v1117 = vpop.permute.xlu0 %1116
      %1120 = vset.pattern.permute.xlu0 0
      %1121 = vperm.xlu0 %1120, %v1113
      %v1122 = vpop.permute.xlu0 %1121
      %v1124 = vmul.f32 %v1096, %v1117
      %v1125 = vmul.f32 %v1097, %v1122
      %v1126 = vmul.f32 %v1098, %v1117
      %v1127 = vmul.f32 %v1099, %v1122
      %v1128 = vmul.f32 %v1100, %v1117
      %v1129 = vmul.f32 %v1101, %v1122
      %v1130 = vmul.f32 %v1102, %v1117
      %v1131 = vmul.f32 %v1103, %v1122
      %v1132 = vmul.f32 %v1104, %v1117
      %v1133 = vmul.f32 %v1105, %v1122
      %v1134 = vmul.f32 %v1106, %v1117
      %v1135 = vmul.f32 %v1107, %v1122
      %v1136 = vmul.f32 %v1108, %v1117
      %v1137 = vmul.f32 %v1109, %v1122
      %v1138 = vmul.f32 %v1110, %v1117
      %v1139 = vmul.f32 %v1111, %v1122
      %v1140 = vsel %vm902, %v1124, 0.0
      %v1141 = vsel %vm902, %v1125, 0.0
      %v1142 = vadd.f32 %v1140, %v1141
      %v1143 = vrot.slane %v1142, 4
      %v1144 = vadd.f32 %v1142, %v1143
      %v1145 = vrot.slane %v1144, 2
      %v1146 = vadd.f32 %v1144, %v1145
      %v1147 = vrot.slane %v1146, 1
      %v1148 = vadd.f32 %v1146, %v1147
      %v1149 = vsel %vm902, %v1126, 0.0
      %v1150 = vsel %vm902, %v1127, 0.0
      %v1151 = vadd.f32 %v1149, %v1150
      %v1152 = vrot.slane %v1151, 4
      %v1153 = vadd.f32 %v1151, %v1152
      %v1154 = vrot.slane %v1153, 2
      %v1155 = vadd.f32 %v1153, %v1154
      %v1156 = vrot.slane %v1155, 1
      %v1157 = vadd.f32 %v1155, %v1156
      %v1158 = vsel %vm902, %v1128, 0.0
      %v1159 = vsel %vm902, %v1129, 0.0
      %v1160 = vadd.f32 %v1158, %v1159
      %v1161 = vrot.slane %v1160, 4
      %v1162 = vadd.f32 %v1160, %v1161
      %v1163 = vrot.slane %v1162, 2
      %v1164 = vadd.f32 %v1162, %v1163
      %v1165 = vrot.slane %v1164, 1
      %v1166 = vadd.f32 %v1164, %v1165
      %v1167 = vsel %vm902, %v1130, 0.0
      %v1168 = vsel %vm902, %v1131, 0.0
      %v1169 = vadd.f32 %v1167, %v1168
      %v1170 = vrot.slane %v1169, 4
      %v1171 = vadd.f32 %v1169, %v1170
      %v1172 = vrot.slane %v1171, 2
      %v1173 = vadd.f32 %v1171, %v1172
      %v1174 = vrot.slane %v1173, 1
      %v1175 = vadd.f32 %v1173, %v1174
      %v1176 = vsel %vm902, %v1132, 0.0
      %v1177 = vsel %vm902, %v1133, 0.0
      %v1178 = vadd.f32 %v1176, %v1177
      %v1179 = vrot.slane %v1178, 4
      %v1180 = vadd.f32 %v1178, %v1179
      %v1181 = vrot.slane %v1180, 2
      %v1182 = vadd.f32 %v1180, %v1181
      %v1183 = vrot.slane %v1182, 1
      %v1184 = vadd.f32 %v1182, %v1183
      %v1185 = vsel %vm902, %v1134, 0.0
      %v1186 = vsel %vm902, %v1135, 0.0
      %v1187 = vadd.f32 %v1185, %v1186
      %v1188 = vrot.slane %v1187, 4
      %v1189 = vadd.f32 %v1187, %v1188
      %v1190 = vrot.slane %v1189, 2
      %v1191 = vadd.f32 %v1189, %v1190
      %v1192 = vrot.slane %v1191, 1
      %v1193 = vadd.f32 %v1191, %v1192
      %v1194 = vsel %vm902, %v1136, 0.0
      %v1195 = vsel %vm902, %v1137, 0.0
      %v1196 = vadd.f32 %v1194, %v1195
      %v1197 = vrot.slane %v1196, 4
      %v1198 = vadd.f32 %v1196, %v1197
      %v1199 = vrot.slane %v1198, 2
      %v1200 = vadd.f32 %v1198, %v1199
      %v1201 = vrot.slane %v1200, 1
      %v1202 = vadd.f32 %v1200, %v1201
      %v1203 = vsel %vm902, %v1138, 0.0
      %v1204 = vsel %vm902, %v1139, 0.0
      %v1205 = vadd.f32 %v1203, %v1204
      %v1206 = vrot.slane %v1205, 4
      %v1207 = vadd.f32 %v1205, %v1206
      %v1208 = vrot.slane %v1207, 2
      %v1209 = vadd.f32 %v1207, %v1208
      %v1210 = vrot.slane %v1209, 1
      %v1211 = vadd.f32 %v1209, %v1210
      %s1212 = scalar_lea.vmem %s5, 32
      %v1213 = vld [vmem:[%s1212] sm:$0xff]
      %v1214 = vld [vmem:[%s1212 + $0x8] sm:$0xff]
      %v1215 = vld [vmem:[%s1212 + $0x10] sm:$0xff]
      %v1216 = vld [vmem:[%s1212 + $0x18] sm:$0xff]
      %v1217 = vld [vmem:[%s6 + $0x2] sm:$0x1]
      %v1218 = vlaneseq
      %v1219 = vshrl.u32 %v1218, 7
      %v1220 = vsub.s32 0, %v1219
      %v1221 = vrot.slane %v1217, %v1220
      %v1230 = vsel %vm661, %v1157, %v1148
      %v1231 = vsel %vm663, %v1166, %v1230
      %v1232 = vsel %vm665, %v1175, %v1231
      %v1233 = vsel %vm667, %v1184, %v1232
      %v1234 = vsel %vm669, %v1193, %v1233
      %v1235 = vsel %vm671, %v1202, %v1234
      %v1236 = vsel %vm673, %v1211, %v1235
      %v1237 = vsel %vm902, %v1236, 0
      %1239 = vmatprep.subr.mxu0 0.0
      %1240 = vmatpush1.msra.mxu0 %v1213
      %1241 = vmatprep.subr.mxu0 0.0
      %1242 = vmatpush1.msra.mxu0 %v1214
      %1243 = vmatprep.subr.mxu0 0.0
      %1244 = vmatpush1.msra.mxu0 %v1215
      %1245 = vmatprep.subr.mxu0 0.0
      %1246 = vmatpush1.msra.mxu0 %v1216
      %1247 = vmatprep.subr.mxu0 0.0
      %1248 = vmatpush1.msra.mxu0 0.0
      %1249 = vmatprep.subr.mxu0 0.0
      %1250 = vmatpush1.msra.mxu0 0.0
      %1251 = vmatprep.subr.mxu0 0.0
      %1252 = vmatpush1.msra.mxu0 0.0
      %1253 = vmatprep.subr.mxu0 0.0
      %1254 = vmatpush1.msra.mxu0 0.0
      %1255 = vmatprep.subr.mxu0 0.0
      %1256 = vmatpush1.msra.mxu0 0.0
      %1257 = vmatprep.subr.mxu0 0.0
      %1258 = vmatpush1.msra.mxu0 0.0
      %1259 = vmatprep.subr.mxu0 0.0
      %1260 = vmatpush1.msra.mxu0 0.0
      %1261 = vmatprep.subr.mxu0 0.0
      %1262 = vmatpush1.msra.mxu0 0.0
      %1263 = vmatprep.subr.mxu0 0.0
      %1264 = vmatpush1.msra.mxu0 0.0
      %1265 = vmatprep.subr.mxu0 0.0
      %1266 = vmatpush1.msra.mxu0 0.0
      %1267 = vmatprep.subr.mxu0 0.0
      %1268 = vmatpush1.msra.mxu0 0.0
      %1269 = vmatprep.subr.mxu0 0.0
      %1270 = vmatpush1.msra.mxu0 0.0
      %1271 = vmatprep.subr.mxu0 0.0
      %1272 = vmatpush1.msra.mxu0 0.0
      %1273 = vmatprep.subr.mxu0 0.0
      %1274 = vmatpush1.msra.mxu0 0.0
      %1275 = vmatprep.subr.mxu0 0.0
      %1276 = vmatpush1.msra.mxu0 0.0
      %1277 = vmatprep.subr.mxu0 0.0
      %1278 = vmatpush1.msra.mxu0 0.0
      %1279 = vmatprep.subr.mxu0 0.0
      %1280 = vmatpush1.msra.mxu0 0.0
      %1281 = vmatprep.subr.mxu0 0.0
      %1282 = vmatpush1.msra.mxu0 0.0
      %1283 = vmatprep.subr.mxu0 0.0
      %1284 = vmatpush1.msra.mxu0 0.0
      %1285 = vmatprep.subr.mxu0 0.0
      %1286 = vmatpush1.msra.mxu0 0.0
      %1287 = vmatprep.subr.mxu0 0.0
      %1288 = vmatpush1.msra.mxu0 0.0
      %1289 = vmatprep.subr.mxu0 0.0
      %1290 = vmatpush1.msra.mxu0 0.0
      %1291 = vmatprep.subr.mxu0 0.0
      %1292 = vmatpush1.msra.mxu0 0.0
      %1293 = vmatprep.subr.mxu0 0.0
      %1294 = vmatpush1.msra.mxu0 0.0
      %1295 = vmatprep.subr.mxu0 0.0
      %1296 = vmatpush1.msra.mxu0 0.0
      %1297 = vmatprep.subr.mxu0 0.0
      %1298 = vmatpush1.msra.mxu0 0.0
      %1299 = vmatprep.subr.mxu0 0.0
      %1300 = vmatpush1.msra.mxu0 0.0
      %1301 = vmatprep.subr.mxu0 0.0
      %1302 = vmatpush1.msra.mxu0 0.0
      %1303 = vmatprep.mubr.f32.mxu0 0.0
      %1304 = vmatmul.mubr.f32.gmra.mrb[0].mxu0 %v1237
      %v1305 = vpop.f32.mrb[0].mxu0
      %v1306 = vadd.f32 %v1221, %v1305
      %v1307 = vpop.f32.mrb[0].mxu0
      %1308 = vdwg.mxu0
      %v1309 = vmax.f32 %v1306, 0.0
      %s1310 = scalar_lea.vmem %s5, 64
      %v1311 = vld [vmem:[%s1310] sm:$0xff]
      %v1312 = vld [vmem:[%s1310 + $0x8] sm:$0xff]
      %v1313 = vld [vmem:[%s1310 + $0x10] sm:$0xff]
      %v1314 = vld [vmem:[%s1310 + $0x18] sm:$0xff]
      %v1315 = vld [vmem:[%s6 + $0x3] sm:$0x1]
      %v1316 = vlaneseq
      %v1317 = vshrl.u32 %v1316, 7
      %v1318 = vsub.s32 0, %v1317
      %v1319 = vrot.slane %v1315, %v1318
      %v1321 = vsel %vm902, %v1309, 0
      %1323 = vmatprep.subr.mxu0 0.0
      %1324 = vmatpush1.msra.mxu0 %v1311
      %1325 = vmatprep.subr.mxu0 0.0
      %1326 = vmatpush1.msra.mxu0 %v1312
      %1327 = vmatprep.subr.mxu0 0.0
      %1328 = vmatpush1.msra.mxu0 %v1313
      %1329 = vmatprep.subr.mxu0 0.0
      %1330 = vmatpush1.msra.mxu0 %v1314
      %1331 = vmatprep.subr.mxu0 0.0
      %1332 = vmatpush1.msra.mxu0 0.0
      %1333 = vmatprep.subr.mxu0 0.0
      %1334 = vmatpush1.msra.mxu0 0.0
      %1335 = vmatprep.subr.mxu0 0.0
      %1336 = vmatpush1.msra.mxu0 0.0
      %1337 = vmatprep.subr.mxu0 0.0
      %1338 = vmatpush1.msra.mxu0 0.0
      %1339 = vmatprep.subr.mxu0 0.0
      %1340 = vmatpush1.msra.mxu0 0.0
      %1341 = vmatprep.subr.mxu0 0.0
      %1342 = vmatpush1.msra.mxu0 0.0
      %1343 = vmatprep.subr.mxu0 0.0
      %1344 = vmatpush1.msra.mxu0 0.0
      %1345 = vmatprep.subr.mxu0 0.0
      %1346 = vmatpush1.msra.mxu0 0.0
      %1347 = vmatprep.subr.mxu0 0.0
      %1348 = vmatpush1.msra.mxu0 0.0
      %1349 = vmatprep.subr.mxu0 0.0
      %1350 = vmatpush1.msra.mxu0 0.0
      %1351 = vmatprep.subr.mxu0 0.0
      %1352 = vmatpush1.msra.mxu0 0.0
      %1353 = vmatprep.subr.mxu0 0.0
      %1354 = vmatpush1.msra.mxu0 0.0
      %1355 = vmatprep.subr.mxu0 0.0
      %1356 = vmatpush1.msra.mxu0 0.0
      %1357 = vmatprep.subr.mxu0 0.0
      %1358 = vmatpush1.msra.mxu0 0.0
      %1359 = vmatprep.subr.mxu0 0.0
      %1360 = vmatpush1.msra.mxu0 0.0
      %1361 = vmatprep.subr.mxu0 0.0
      %1362 = vmatpush1.msra.mxu0 0.0
      %1363 = vmatprep.subr.mxu0 0.0
      %1364 = vmatpush1.msra.mxu0 0.0
      %1365 = vmatprep.subr.mxu0 0.0
      %1366 = vmatpush1.msra.mxu0 0.0
      %1367 = vmatprep.subr.mxu0 0.0
      %1368 = vmatpush1.msra.mxu0 0.0
      %1369 = vmatprep.subr.mxu0 0.0
      %1370 = vmatpush1.msra.mxu0 0.0
      %1371 = vmatprep.subr.mxu0 0.0
      %1372 = vmatpush1.msra.mxu0 0.0
      %1373 = vmatprep.subr.mxu0 0.0
      %1374 = vmatpush1.msra.mxu0 0.0
      %1375 = vmatprep.subr.mxu0 0.0
      %1376 = vmatpush1.msra.mxu0 0.0
      %1377 = vmatprep.subr.mxu0 0.0
      %1378 = vmatpush1.msra.mxu0 0.0
      %1379 = vmatprep.subr.mxu0 0.0
      %1380 = vmatpush1.msra.mxu0 0.0
      %1381 = vmatprep.subr.mxu0 0.0
      %1382 = vmatpush1.msra.mxu0 0.0
      %1383 = vmatprep.subr.mxu0 0.0
      %1384 = vmatpush1.msra.mxu0 0.0
      %1385 = vmatprep.subr.mxu0 0.0
      %1386 = vmatpush1.msra.mxu0 0.0
      %1387 = vmatprep.mubr.f32.mxu0 0.0
      %1388 = vmatmul.mubr.f32.gmra.mrb[0].mxu0 %v1321
      %v1389 = vpop.f32.mrb[0].mxu0
      %v1390 = vadd.f32 %v1319, %v1389
      %v1391 = vpop.f32.mrb[0].mxu0
      %1392 = vdwg.mxu0
      %v1393 = vmax.f32 %v1390, 0.0
      %v1394 = vld [vmem:[%s7] sm:$0xf]
      %v1395 = vld [vmem:[%s8] sm:$0xff]
      %v1396 = vld [vmem:[%s8 + $0x8] sm:$0xff]
      %v1397 = vld [vmem:[%s8 + $0x10] sm:$0xff]
      %v1398 = vld [vmem:[%s8 + $0x18] sm:$0xff]
      %v1400 = vsel %vm902, %v1393, 0
      %1402 = vmatprep.subr.mxu0 0.0
      %1403 = vmatpush1.msra.mxu0 %v1395
      %1404 = vmatprep.subr.mxu0 0.0
      %1405 = vmatpush1.msra.mxu0 %v1396
      %1406 = vmatprep.subr.mxu0 0.0
      %1407 = vmatpush1.msra.mxu0 %v1397
      %1408 = vmatprep.subr.mxu0 0.0
      %1409 = vmatpush1.msra.mxu0 %v1398
      %1410 = vmatprep.subr.mxu0 0.0
      %1411 = vmatpush1.msra.mxu0 0.0
      %1412 = vmatprep.subr.mxu0 0.0
      %1413 = vmatpush1.msra.mxu0 0.0
      %1414 = vmatprep.subr.mxu0 0.0
      %1415 = vmatpush1.msra.mxu0 0.0
      %1416 = vmatprep.subr.mxu0 0.0
      %1417 = vmatpush1.msra.mxu0 0.0
      %1418 = vmatprep.subr.mxu0 0.0
      %1419 = vmatpush1.msra.mxu0 0.0
      %1420 = vmatprep.subr.mxu0 0.0
      %1421 = vmatpush1.msra.mxu0 0.0
      %1422 = vmatprep.subr.mxu0 0.0
      %1423 = vmatpush1.msra.mxu0 0.0
      %1424 = vmatprep.subr.mxu0 0.0
      %1425 = vmatpush1.msra.mxu0 0.0
      %1426 = vmatprep.subr.mxu0 0.0
      %1427 = vmatpush1.msra.mxu0 0.0
      %1428 = vmatprep.subr.mxu0 0.0
      %1429 = vmatpush1.msra.mxu0 0.0
      %1430 = vmatprep.subr.mxu0 0.0
      %1431 = vmatpush1.msra.mxu0 0.0
      %1432 = vmatprep.subr.mxu0 0.0
      %1433 = vmatpush1.msra.mxu0 0.0
      %1434 = vmatprep.subr.mxu0 0.0
      %1435 = vmatpush1.msra.mxu0 0.0
      %1436 = vmatprep.subr.mxu0 0.0
      %1437 = vmatpush1.msra.mxu0 0.0
      %1438 = vmatprep.subr.mxu0 0.0
      %1439 = vmatpush1.msra.mxu0 0.0
      %1440 = vmatprep.subr.mxu0 0.0
      %1441 = vmatpush1.msra.mxu0 0.0
      %1442 = vmatprep.subr.mxu0 0.0
      %1443 = vmatpush1.msra.mxu0 0.0
      %1444 = vmatprep.subr.mxu0 0.0
      %1445 = vmatpush1.msra.mxu0 0.0
      %1446 = vmatprep.subr.mxu0 0.0
      %1447 = vmatpush1.msra.mxu0 0.0
      %1448 = vmatprep.subr.mxu0 0.0
      %1449 = vmatpush1.msra.mxu0 0.0
      %1450 = vmatprep.subr.mxu0 0.0
      %1451 = vmatpush1.msra.mxu0 0.0
      %1452 = vmatprep.subr.mxu0 0.0
      %1453 = vmatpush1.msra.mxu0 0.0
      %1454 = vmatprep.subr.mxu0 0.0
      %1455 = vmatpush1.msra.mxu0 0.0
      %1456 = vmatprep.subr.mxu0 0.0
      %1457 = vmatpush1.msra.mxu0 0.0
      %1458 = vmatprep.subr.mxu0 0.0
      %1459 = vmatpush1.msra.mxu0 0.0
      %1460 = vmatprep.subr.mxu0 0.0
      %1461 = vmatpush1.msra.mxu0 0.0
      %1462 = vmatprep.subr.mxu0 0.0
      %1463 = vmatpush1.msra.mxu0 0.0
      %1464 = vmatprep.subr.mxu0 0.0
      %1465 = vmatpush1.msra.mxu0 0.0
      %1466 = vmatprep.mubr.f32.mxu0 0.0
      %1467 = vmatmul.mubr.f32.gmra.mrb[0].mxu0 %v1400
      %v1468 = vpop.f32.mrb[0].mxu0
      %v1469 = vadd.f32 0.0, %v1468
      %v1470 = vpop.f32.mrb[0].mxu0
      %1471 = vdwg.mxu0
      %v1473 = vsel %vm503, %v1394, 0
      %1475 = vmatprep.subr.mxu0 0.0
      %1476 = vmatpush1.msra.mxu0 %v1473
      %1477 = vmatprep.subr.mxu0 0.0
      %1478 = vmatpush1.msra.mxu0 0.0
      %1479 = vmatprep.subr.mxu0 0.0
      %1480 = vmatpush1.msra.mxu0 0.0
      %1481 = vmatprep.subr.mxu0 0.0
      %1482 = vmatpush1.msra.mxu0 0.0
      %1483 = vmatprep.subr.mxu0 0.0
      %1484 = vmatpush1.msra.mxu0 0.0
      %1485 = vmatprep.subr.mxu0 0.0
      %1486 = vmatpush1.msra.mxu0 0.0
      %1487 = vmatprep.subr.mxu0 0.0
      %1488 = vmatpush1.msra.mxu0 0.0
      %1489 = vmatprep.subr.mxu0 0.0
      %1490 = vmatpush1.msra.mxu0 0.0
      %1491 = vmatprep.subr.mxu0 0.0
      %1492 = vmatpush1.msra.mxu0 0.0
      %1493 = vmatprep.subr.mxu0 0.0
      %1494 = vmatpush1.msra.mxu0 0.0
      %1495 = vmatprep.subr.mxu0 0.0
      %1496 = vmatpush1.msra.mxu0 0.0
      %1497 = vmatprep.subr.mxu0 0.0
      %1498 = vmatpush1.msra.mxu0 0.0
      %1499 = vmatprep.subr.mxu0 0.0
      %1500 = vmatpush1.msra.mxu0 0.0
      %1501 = vmatprep.subr.mxu0 0.0
      %1502 = vmatpush1.msra.mxu0 0.0
      %1503 = vmatprep.subr.mxu0 0.0
      %1504 = vmatpush1.msra.mxu0 0.0
      %1505 = vmatprep.subr.mxu0 0.0
      %1506 = vmatpush1.msra.mxu0 0.0
      %1507 = vmatprep.subr.mxu0 0.0
      %1508 = vmatpush1.msra.mxu0 0.0
      %1509 = vmatprep.subr.mxu0 0.0
      %1510 = vmatpush1.msra.mxu0 0.0
      %1511 = vmatprep.subr.mxu0 0.0
      %1512 = vmatpush1.msra.mxu0 0.0
      %1513 = vmatprep.subr.mxu0 0.0
      %1514 = vmatpush1.msra.mxu0 0.0
      %1515 = vmatprep.subr.mxu0 0.0
      %1516 = vmatpush1.msra.mxu0 0.0
      %1517 = vmatprep.subr.mxu0 0.0
      %1518 = vmatpush1.msra.mxu0 0.0
      %1519 = vmatprep.subr.mxu0 0.0
      %1520 = vmatpush1.msra.mxu0 0.0
      %1521 = vmatprep.subr.mxu0 0.0
      %1522 = vmatpush1.msra.mxu0 0.0
      %1523 = vmatprep.subr.mxu0 0.0
      %1524 = vmatpush1.msra.mxu0 0.0
      %1525 = vmatprep.subr.mxu0 0.0
      %1526 = vmatpush1.msra.mxu0 0.0
      %1527 = vmatprep.subr.mxu0 0.0
      %1528 = vmatpush1.msra.mxu0 0.0
      %1529 = vmatprep.subr.mxu0 0.0
      %1530 = vmatpush1.msra.mxu0 0.0
      %1531 = vmatprep.subr.mxu0 0.0
      %1532 = vmatpush1.msra.mxu0 0.0
      %1533 = vmatprep.subr.mxu0 0.0
      %1534 = vmatpush1.msra.mxu0 0.0
      %1535 = vmatprep.subr.mxu0 0.0
      %1536 = vmatpush1.msra.mxu0 0.0
      %1537 = vmatprep.subr.mxu0 0.0
      %1538 = vmatpush1.msra.mxu0 0.0
      %1539 = vmatprep.mubr.f32.mxu0 0.0
      %1540 = vmatmul.mubr.f32.gmra.mrb[0].mxu0 %v675
      %v1541 = vpop.f32.mrb[0].mxu0
      %v1542 = vadd.f32 %v1469, %v1541
      %v1543 = vpop.f32.mrb[0].mxu0
      %1544 = vdwg.mxu0
      %v1545 = vld [vmem:[%s9] sm:$0x1]
      %v1547 = vlaneseq
      %v1548 = vshrl.u32 %v1547, 7
      %v1549 = vsub.s32 0, %v1548
      %v1550 = vrot.slane %v1545, %v1549
      %v1552 = vadd.f32 %v1542, %v1550
      %v1553 = vsel %vm381, %v1552, -inf
      %1554 = vmax.xlane.f32.xlu0 %v1553
      %v1555 = vpop.xlane.xlu0 %1554
      %v1556 = vsub.f32 %v1552, %v1555
      %v1557 = vmul.f32 %v1556, 1.442695
      %v1558 = vpow.pop %v1557
      %v1559 = vsel %vm381, %v1558, 0.0
      %1560 = vadd.xlane.f32.xlu0 %v1559
      %v1561 = vpop.xlane.xlu0 %1560
      %v1562 = vlog2.pop %v1561
      %v1563 = vmul.f32 %v1562, 0.6931472
      %v1564 = vsub.f32 %v1556, %v1563
      %1565 = vst.msk [vmem:[%s337] sm:$0xff] %vm381, %v1564
      %p1566 = scmp.lt.s32.totalorder %s22, 1
      %s1567 = scalar_select %p1566, %s22, 1
      %s1568 = smul.addr %s1567, 8
      %s1569 = scalar_lea.vmem %s10, %s1568
      // Predicated region
      $region57: #{tpu_custom_call.1} parent=55 // pred_check
        %p1570 = pneg %p234
      $region58: #{tpu_custom_call.1} parent=55 // pred_check_branch
        %1572 = sbr.rel (%p1570) target = $region60
      $region59: #{tpu_custom_call.1} parent=55 // pred_region
        _
      $region60: #{tpu_custom_call.1} parent=55 // pred_fallthru
        _
    $region56: #{tpu_custom_call.1} parent=5 // pred_fallthru
      _
    %p1573 = scmp.le.s32.totalorder 2, %s17
    // Predicated region
    $region61: #{tpu_custom_call.1} parent=5 // pred_check
      %p1574 = pneg %p1573
    $region62: #{tpu_custom_call.1} parent=5 // pred_check_branch
      %1576 = sbr.rel (%p1574) target = $region64
    $region63: #{tpu_custom_call.1} parent=5 // pred_region
      %s1577 = ssub.s32 %s17, 2
      // Predicated region
      $region65: #{tpu_custom_call.1} parent=63 // pred_check
        %p1578 = pneg %p240
      $region66: #{tpu_custom_call.1} parent=63 // pred_check_branch
        %1580 = sbr.rel (%p1578) target = $region68
      $region67: #{tpu_custom_call.1} parent=63 // pred_region
        %p1581 = scmp.lt.s32.totalorder %s23, 1
        %s1582 = scalar_select %p1581, %s23, 1
        %s1583 = smul.addr %s1582, 8
        %s1584 = scalar_lea.vmem %s10, %s1583
      $region68: #{tpu_custom_call.1} parent=63 // pred_fallthru
        _
    $region64: #{tpu_custom_call.1} parent=5 // pred_fallthru
      _
  $region6: #{tpu_custom_call.1} parent=0 // loop_footer
    %s21 = sadd.s32 1, %s17
  $region7: #{tpu_custom_call.1} parent=0 // loop_footer_branch
    %16 = sbr.rel target = $region3
  $region8: #{tpu_custom_call.1} parent=0 // loop_exit
    _

</llo_original>
